<compile_context>
chip_gen: v7x
topology: tpu7x:2x2x1
jax: 0.10.0
libtpu: 0.0.40
codegen_flags: <defaults>
</compile_context>

<pallas_src>
import functools

import jax
import jax.numpy as jnp
from jax.experimental import pallas as pl
from jax.experimental.pallas import tpu as pltpu

NUM_HEADS = 4
LN_EPS = 1e-12


def _layer_norm(x, gamma, beta):
    mu = jnp.mean(x, axis=-1, keepdims=True)
    var = jnp.mean((x - mu) ** 2, axis=-1, keepdims=True)
    return (x - mu) * jax.lax.rsqrt(var + LN_EPS) * gamma + beta


# ---------------------------------------------------------------------------
# Fused kernel: transformer encoder layer + output_mask pooling (whole batch).
# ---------------------------------------------------------------------------
def encoder_pool_kernel(x_ref, mb_ref, sel_ref,
                        wqkv_ref, wo_ref, wf1_ref, wf2_ref,
                        bqkv_ref, bf1_ref, ph_ref,
                        o_ref, attn_scr):
    B, S, H = x_ref.shape
    hd = H // NUM_HEADS
    scale = 1.0 / float(hd) ** 0.5

    x = x_ref[...].reshape(B * S, H)          # fused M = B*S axis (f32 already)
    key_bias = mb_ref[...]                    # (B, 1, S) additive mask bias

    # Packed per-H parameters: rows = [bo, g1, be1, bf2, g2, be2].
    ph = ph_ref[...]
    bo, g1, be1 = ph[0:1, :], ph[1:2, :], ph[2:3, :]
    bf2, g2, be2 = ph[3:4, :], ph[4:5, :], ph[5:6, :]

    # Fused QKV projection: one (B*S, H) x (H, 3H) GEMM.
    qkv = jnp.dot(x, wqkv_ref[...], preferred_element_type=jnp.float32) + bqkv_ref[...]
    q = qkv[:, 0 * H:1 * H].reshape(B, S, H)
    k = qkv[:, 1 * H:2 * H].reshape(B, S, H)
    v = qkv[:, 2 * H:3 * H].reshape(B, S, H)

    # Per-head attention, batched over B; head outputs written directly into the
    # (B*S, H) accumulator scratch (no concatenate / relayout).
    for h in range(NUM_HEADS):                # static unrolled loop over heads
        qh = q[:, :, h * hd:(h + 1) * hd]
        kh = k[:, :, h * hd:(h + 1) * hd]
        vh = v[:, :, h * hd:(h + 1) * hd]
        sc = jnp.einsum('bqd,bkd->bqk', qh, kh,
                        preferred_element_type=jnp.float32) * scale + key_bias
        sc = sc - jnp.max(sc, axis=-1, keepdims=True)
        p = jnp.exp(sc)
        p = p * pl.reciprocal(jnp.sum(p, axis=-1, keepdims=True), approx=True)
        oh = jnp.einsum('bqk,bkd->bqd', p, vh, preferred_element_type=jnp.float32)
        attn_scr[:, h * hd:(h + 1) * hd] = oh.reshape(B * S, hd)

    attn = jnp.dot(attn_scr[...], wo_ref[...], preferred_element_type=jnp.float32) + bo
    x1 = _layer_norm(x + attn, g1, be1)

    ff = jnp.dot(x1, wf1_ref[...], preferred_element_type=jnp.float32) + bf1_ref[...]
    ff = jax.nn.gelu(ff, approximate=True)
    ff = jnp.dot(ff, wf2_ref[...], preferred_element_type=jnp.float32) + bf2
    hidden = _layer_norm(x1 + ff, g2, be2)    # (B*S, H)

    # Fused output_mask pooling: sel is (B, W, S) selection/weight matrix.
    sel = sel_ref[...]
    counts = jnp.sum(sel, axis=-1, keepdims=True)                         # (B, W, 1)
    sums = jnp.einsum('bws,bsh->bwh', sel, hidden.reshape(B, S, H),
                      preferred_element_type=jnp.float32)                 # (B, W, H)
    inv = pl.reciprocal(jnp.maximum(counts, 1.0), approx=True)
    o_ref[...] = (sums * inv).astype(o_ref.dtype)


def run_encoder_pool(x, mask_bias, sel, p):
    B, S, H = x.shape
    W = sel.shape[1]
    F = p["wf1"].shape[1]

    def spec(shp):
        return pl.BlockSpec(shp, lambda i, _s=shp: (0,) * len(_s))

    return pl.pallas_call(
        encoder_pool_kernel,
        out_shape=jax.ShapeDtypeStruct((B, W, H), jnp.float32),
        grid=(1,),
        in_specs=[
            spec((B, S, H)),      # x (token embeddings)
            spec((B, 1, S)),      # attention mask additive bias
            spec((B, W, S)),      # subword->word selection matrix
            spec((H, 3 * H)),     # packed Wq|Wk|Wv
            spec((H, H)),         # Wo
            spec((H, F)),         # FFN W1
            spec((F, H)),         # FFN W2
            spec((1, 3 * H)),     # packed bq|bk|bv
            spec((1, F)),         # FFN b1
            spec((6, H)),         # packed [bo, g1, be1, bf2, g2, be2]
        ],
        out_specs=spec((B, W, H)),
        scratch_shapes=[pltpu.VMEM((B * S, H), jnp.float32)],
        compiler_params=pltpu.CompilerParams(dimension_semantics=("arbitrary",)),
    )(x, mask_bias, sel, p["wqkv"], p["wo"], p["wf1"], p["wf2"],
      p["bqkv"], p["bf1"], p["ph"])


class ContextEncoder:
    """JAX/Pallas counterpart of wsd_models.models.ContextEncoder."""

    def __init__(self, key, vocab, seq_len, hidden, ffn, freeze_context=True):
        self.is_frozen = freeze_context
        self.context_hdim = hidden
        std = 0.02
        ks = jax.random.split(key, 10)
        H, F = hidden, ffn
        wq = jax.random.normal(ks[2], (H, H), jnp.float32) * std
        wk = jax.random.normal(ks[3], (H, H), jnp.float32) * std
        wv = jax.random.normal(ks[4], (H, H), jnp.float32) * std
        bo = jnp.zeros((1, H), jnp.float32)
        g1 = jnp.ones((1, H), jnp.float32)
        be1 = jnp.zeros((1, H), jnp.float32)
        bf2 = jnp.zeros((1, H), jnp.float32)
        g2 = jnp.ones((1, H), jnp.float32)
        be2 = jnp.zeros((1, H), jnp.float32)
        self.params = {
            "word_emb": jax.random.normal(ks[0], (vocab, H), jnp.float32) * std,
            "pos_emb": jax.random.normal(ks[1], (seq_len, H), jnp.float32) * std,
            # Packed weights/biases to cut DMA descriptor count and fuse QKV GEMM.
            "wqkv": jnp.concatenate([wq, wk, wv], axis=1),           # (H, 3H)
            "bqkv": jnp.zeros((1, 3 * H), jnp.float32),
            "wo": jax.random.normal(ks[5], (H, H), jnp.float32) * std,
            "wf1": jax.random.normal(ks[6], (H, F), jnp.float32) * std,
            "bf1": jnp.zeros((1, F), jnp.float32),
            "wf2": jax.random.normal(ks[7], (F, H), jnp.float32) * std,
            "ph": jnp.concatenate([bo, g1, be1, bf2, g2, be2], axis=0),  # (6, H)
        }

    @functools.partial(jax.jit, static_argnums=(0, 4, 5))
    def forward(self, input_ids, attn_mask, output_mask, flag, num_words):
        p = self.params
        B, S = input_ids.shape

        # Embeddings (glue: gather + add).
        x = jnp.take(p["word_emb"], input_ids, axis=0) + p["pos_emb"][None, :, :]

        # Additive attention-mask bias [B, 1, S].
        mask_bias = ((1.0 - attn_mask.astype(jnp.float32)) * -1e9)[:, None, :]

        # Build subword->word selection matrix [B, W, S] from output_mask.
        w_ids = jnp.arange(num_words)
        eq = (output_mask[:, None, :] == w_ids[None, :, None]).astype(jnp.float32)
        if flag:
            # TODO(synk): exact semantics of process_encoder_outputs2 unknown;
            # implemented as first-subword selection (vs. subword averaging).
            cum = jnp.cumsum(eq, axis=-1)
            sel = eq * (cum == 1.0).astype(jnp.float32)
        else:
            sel = eq                              # process_encoder_outputs: mean pool

        # Fused Pallas kernel: encoder layer + output_mask pooling -> [B, W, H].
        pooled = run_encoder_pool(x, mask_bias, sel, p)
        if self.is_frozen:                        # mirrors torch.no_grad()
            pooled = jax.lax.stop_gradient(pooled)

        # torch.cat(dim=0) equivalent -> [B*W, H].
        return pooled.reshape(B * num_words, -1)


if __name__ == "__main__":
    B, S, H, F, V, W = 2, 16, 64, 128, 50, 4

    key = jax.random.PRNGKey(0)
    k_param, k_ids = jax.random.split(key)

    model = ContextEncoder(k_param, vocab=V, seq_len=S, hidden=H, ffn=F,
                           freeze_context=True)

    input_ids = jax.random.randint(k_ids, (B, S), 0, V, dtype=jnp.int32)
    attn_mask = jnp.array(
        [[1] * 16,
         [1] * 12 + [0] * 4], dtype=jnp.int32)
    output_mask = jnp.array(
        [[-1, 0, 0, 1, 1, 1, 2, 3, 3, -1, -1, -1, -1, -1, -1, -1],
         [-1, 0, 1, 1, 2, 2, 3, -1, -1, -1, -1, -1, -1, -1, -1, -1]],
        dtype=jnp.int32)

    out = model.forward(input_ids, attn_mask, output_mask, False, W)
    out = jax.block_until_ready(out)
    assert out.shape == (B * W, H), out.shape
    assert bool(jnp.all(jnp.isfinite(out)))
    print("KERNEL_OK")
</pallas_src>

<mosaic_0001>
module attributes {stable_mosaic.version = 11 : i64} {
  func.func @encoder_pool_kernel(%arg0: i32, %arg1: memref<2x16x64xf32, #tpu.memory_space<vmem>>, %arg2: memref<2x1x16xf32, #tpu.memory_space<vmem>>, %arg3: memref<2x4x16xf32, #tpu.memory_space<vmem>>, %arg4: memref<64x192xf32, #tpu.memory_space<vmem>>, %arg5: memref<64x64xf32, #tpu.memory_space<vmem>>, %arg6: memref<64x128xf32, #tpu.memory_space<vmem>>, %arg7: memref<128x64xf32, #tpu.memory_space<vmem>>, %arg8: memref<1x192xf32, #tpu.memory_space<vmem>>, %arg9: memref<1x128xf32, #tpu.memory_space<vmem>>, %arg10: memref<6x64xf32, #tpu.memory_space<vmem>>, %arg11: memref<2x4x64xf32, #tpu.memory_space<vmem>>, %arg12: memref<32x64xf32, #tpu.memory_space<vmem>>) attributes {dimension_semantics = [#tpu.dimension_semantics<arbitrary>], iteration_bounds = array<i64: 1>, scalar_prefetch = 0 : i64, scratch_operands = 1 : i64, tpu.core_type = #tpu.core_type<tc>, window_params = [{pipeline_mode = #tpu.pipeline_mode<synchronous>, transform_indices = @transform_0, window_bounds = array<i64: 2, 16, 64>}, {pipeline_mode = #tpu.pipeline_mode<synchronous>, transform_indices = @transform_1, window_bounds = array<i64: 2, 1, 16>}, {pipeline_mode = #tpu.pipeline_mode<synchronous>, transform_indices = @transform_2, window_bounds = array<i64: 2, 4, 16>}, {pipeline_mode = #tpu.pipeline_mode<synchronous>, transform_indices = @transform_3, window_bounds = array<i64: 64, 192>}, {pipeline_mode = #tpu.pipeline_mode<synchronous>, transform_indices = @transform_4, window_bounds = array<i64: 64, 64>}, {pipeline_mode = #tpu.pipeline_mode<synchronous>, transform_indices = @transform_5, window_bounds = array<i64: 64, 128>}, {pipeline_mode = #tpu.pipeline_mode<synchronous>, transform_indices = @transform_6, window_bounds = array<i64: 128, 64>}, {pipeline_mode = #tpu.pipeline_mode<synchronous>, transform_indices = @transform_7, window_bounds = array<i64: 1, 192>}, {pipeline_mode = #tpu.pipeline_mode<synchronous>, transform_indices = @transform_8, window_bounds = array<i64: 1, 128>}, {pipeline_mode = #tpu.pipeline_mode<synchronous>, transform_indices = @transform_9, window_bounds = array<i64: 6, 64>}, {pipeline_mode = #tpu.pipeline_mode<synchronous>, transform_indices = @transform_10, window_bounds = array<i64: 2, 4, 64>}]} {
    %c0 = arith.constant 0 : index
    %c0_0 = arith.constant 0 : index
    %c0_1 = arith.constant 0 : index
    %0 = vector.load %arg1[%c0, %c0_0, %c0_1] : memref<2x16x64xf32, #tpu.memory_space<vmem>>, vector<2x16x64xf32>
    %1 = vector.shape_cast %0 : vector<2x16x64xf32> to vector<32x64xf32>
    %c0_2 = arith.constant 0 : index
    %c0_3 = arith.constant 0 : index
    %c0_4 = arith.constant 0 : index
    %2 = vector.load %arg2[%c0_2, %c0_3, %c0_4] : memref<2x1x16xf32, #tpu.memory_space<vmem>>, vector<2x1x16xf32>
    %c0_5 = arith.constant 0 : index
    %c0_6 = arith.constant 0 : index
    %3 = vector.load %arg10[%c0_5, %c0_6] : memref<6x64xf32, #tpu.memory_space<vmem>>, vector<6x64xf32>
    %4 = vector.extract_strided_slice %3 {offsets = [0, 0], sizes = [1, 64], strides = [1, 1]} : vector<6x64xf32> to vector<1x64xf32>
    %5 = vector.extract_strided_slice %3 {offsets = [1, 0], sizes = [1, 64], strides = [1, 1]} : vector<6x64xf32> to vector<1x64xf32>
    %6 = vector.extract_strided_slice %3 {offsets = [2, 0], sizes = [1, 64], strides = [1, 1]} : vector<6x64xf32> to vector<1x64xf32>
    %7 = vector.extract_strided_slice %3 {offsets = [3, 0], sizes = [1, 64], strides = [1, 1]} : vector<6x64xf32> to vector<1x64xf32>
    %8 = vector.extract_strided_slice %3 {offsets = [4, 0], sizes = [1, 64], strides = [1, 1]} : vector<6x64xf32> to vector<1x64xf32>
    %9 = vector.extract_strided_slice %3 {offsets = [5, 0], sizes = [1, 64], strides = [1, 1]} : vector<6x64xf32> to vector<1x64xf32>
    %c0_7 = arith.constant 0 : index
    %c0_8 = arith.constant 0 : index
    %10 = vector.load %arg4[%c0_7, %c0_8] : memref<64x192xf32, #tpu.memory_space<vmem>>, vector<64x192xf32>
    %cst = arith.constant dense<0.000000e+00> : vector<32x192xf32>
    %11 = tpu.matmul %1, %10, %cst {dimension_numbers = #tpu.dot_dimension_numbers<[1], [0], [0], [1], [0, 0, 1, 1], [], []>} : vector<32x64xf32>, vector<64x192xf32>, vector<32x192xf32> -> vector<32x192xf32>
    %c0_9 = arith.constant 0 : index
    %c0_10 = arith.constant 0 : index
    %12 = vector.load %arg8[%c0_9, %c0_10] : memref<1x192xf32, #tpu.memory_space<vmem>>, vector<1x192xf32>
    %13 = vector.broadcast %12 : vector<1x192xf32> to vector<32x192xf32>
    %14 = arith.addf %11, %13 : vector<32x192xf32>
    %15 = vector.extract_strided_slice %14 {offsets = [0, 0], sizes = [32, 64], strides = [1, 1]} : vector<32x192xf32> to vector<32x64xf32>
    %16 = vector.shape_cast %15 : vector<32x64xf32> to vector<2x16x64xf32>
    %17 = vector.extract_strided_slice %14 {offsets = [0, 64], sizes = [32, 64], strides = [1, 1]} : vector<32x192xf32> to vector<32x64xf32>
    %18 = vector.shape_cast %17 : vector<32x64xf32> to vector<2x16x64xf32>
    %19 = vector.extract_strided_slice %14 {offsets = [0, 128], sizes = [32, 64], strides = [1, 1]} : vector<32x192xf32> to vector<32x64xf32>
    %20 = vector.shape_cast %19 : vector<32x64xf32> to vector<2x16x64xf32>
    %21 = vector.extract_strided_slice %16 {offsets = [0, 0, 0], sizes = [2, 16, 16], strides = [1, 1, 1]} : vector<2x16x64xf32> to vector<2x16x16xf32>
    %22 = vector.extract_strided_slice %18 {offsets = [0, 0, 0], sizes = [2, 16, 16], strides = [1, 1, 1]} : vector<2x16x64xf32> to vector<2x16x16xf32>
    %23 = vector.extract_strided_slice %20 {offsets = [0, 0, 0], sizes = [2, 16, 16], strides = [1, 1, 1]} : vector<2x16x64xf32> to vector<2x16x16xf32>
    "tpu.trace_start"() <{level = 10 : i32, message = "bqd,bkd->bqk"}> : () -> ()
    %cst_11 = arith.constant dense<0.000000e+00> : vector<2x16x16xf32>
    %24 = tpu.matmul %21, %22, %cst_11 {dimension_numbers = #tpu.dot_dimension_numbers<[2], [2], [1], [1], [0, 0, 0, 1, 1, 1], [0], [0]>} : vector<2x16x16xf32>, vector<2x16x16xf32>, vector<2x16x16xf32> -> vector<2x16x16xf32>
    "tpu.trace_stop"() : () -> ()
    %cst_12 = arith.constant 2.500000e-01 : f32
    %25 = vector.broadcast %cst_12 : f32 to vector<2x16x16xf32>
    %26 = arith.mulf %24, %25 : vector<2x16x16xf32>
    %27 = vector.broadcast %2 : vector<2x1x16xf32> to vector<2x16x16xf32>
    %28 = arith.addf %26, %27 : vector<2x16x16xf32>
    %cst_13 = arith.constant dense<0xFF800000> : vector<2x16xf32>
    %29 = vector.multi_reduction <maximumf>, %28, %cst_13 [2] : vector<2x16x16xf32> to vector<2x16xf32>
    %30 = vector.shape_cast %29 : vector<2x16xf32> to vector<2x16x1xf32>
    %31 = vector.broadcast %30 : vector<2x16x1xf32> to vector<2x16x16xf32>
    %32 = arith.subf %28, %31 : vector<2x16x16xf32>
    %33 = math.exp %32 : vector<2x16x16xf32>
    %cst_14 = arith.constant dense<0.000000e+00> : vector<2x16xf32>
    %34 = vector.multi_reduction <add>, %33, %cst_14 [2] : vector<2x16x16xf32> to vector<2x16xf32>
    %35 = vector.shape_cast %34 : vector<2x16xf32> to vector<2x16x1xf32>
    %36 = tpu.reciprocal %35 {approx = true} : vector<2x16x1xf32> -> vector<2x16x1xf32>
    %37 = vector.broadcast %36 : vector<2x16x1xf32> to vector<2x16x16xf32>
    %38 = arith.mulf %33, %37 : vector<2x16x16xf32>
    "tpu.trace_start"() <{level = 10 : i32, message = "bqk,bkd->bqd"}> : () -> ()
    %cst_15 = arith.constant dense<0.000000e+00> : vector<2x16x16xf32>
    %39 = tpu.matmul %38, %23, %cst_15 {dimension_numbers = #tpu.dot_dimension_numbers<[2], [1], [1], [2], [0, 0, 0, 1, 1, 2], [0], [0]>} : vector<2x16x16xf32>, vector<2x16x16xf32>, vector<2x16x16xf32> -> vector<2x16x16xf32>
    "tpu.trace_stop"() : () -> ()
    %40 = vector.shape_cast %39 : vector<2x16x16xf32> to vector<32x16xf32>
    %c0_16 = arith.constant 0 : index
    %c0_17 = arith.constant 0 : index
    %41 = vector.load %arg12[%c0_16, %c0_17] : memref<32x64xf32, #tpu.memory_space<vmem>>, vector<32x16xf32>
    tpu.vector_store %arg12[%c0_16, %c0_17], %40 {strides = array<i32>} : memref<32x64xf32, #tpu.memory_space<vmem>>, vector<32x16xf32>,
    %42 = vector.extract_strided_slice %16 {offsets = [0, 0, 16], sizes = [2, 16, 16], strides = [1, 1, 1]} : vector<2x16x64xf32> to vector<2x16x16xf32>
    %43 = vector.extract_strided_slice %18 {offsets = [0, 0, 16], sizes = [2, 16, 16], strides = [1, 1, 1]} : vector<2x16x64xf32> to vector<2x16x16xf32>
    %44 = vector.extract_strided_slice %20 {offsets = [0, 0, 16], sizes = [2, 16, 16], strides = [1, 1, 1]} : vector<2x16x64xf32> to vector<2x16x16xf32>
    "tpu.trace_start"() <{level = 10 : i32, message = "bqd,bkd->bqk"}> : () -> ()
    %cst_18 = arith.constant dense<0.000000e+00> : vector<2x16x16xf32>
    %45 = tpu.matmul %42, %43, %cst_18 {dimension_numbers = #tpu.dot_dimension_numbers<[2], [2], [1], [1], [0, 0, 0, 1, 1, 1], [0], [0]>} : vector<2x16x16xf32>, vector<2x16x16xf32>, vector<2x16x16xf32> -> vector<2x16x16xf32>
    "tpu.trace_stop"() : () -> ()
    %cst_19 = arith.constant 2.500000e-01 : f32
    %46 = vector.broadcast %cst_19 : f32 to vector<2x16x16xf32>
    %47 = arith.mulf %45, %46 : vector<2x16x16xf32>
    %48 = vector.broadcast %2 : vector<2x1x16xf32> to vector<2x16x16xf32>
    %49 = arith.addf %47, %48 : vector<2x16x16xf32>
    %cst_20 = arith.constant dense<0xFF800000> : vector<2x16xf32>
    %50 = vector.multi_reduction <maximumf>, %49, %cst_20 [2] : vector<2x16x16xf32> to vector<2x16xf32>
    %51 = vector.shape_cast %50 : vector<2x16xf32> to vector<2x16x1xf32>
    %52 = vector.broadcast %51 : vector<2x16x1xf32> to vector<2x16x16xf32>
    %53 = arith.subf %49, %52 : vector<2x16x16xf32>
    %54 = math.exp %53 : vector<2x16x16xf32>
    %cst_21 = arith.constant dense<0.000000e+00> : vector<2x16xf32>
    %55 = vector.multi_reduction <add>, %54, %cst_21 [2] : vector<2x16x16xf32> to vector<2x16xf32>
    %56 = vector.shape_cast %55 : vector<2x16xf32> to vector<2x16x1xf32>
    %57 = tpu.reciprocal %56 {approx = true} : vector<2x16x1xf32> -> vector<2x16x1xf32>
    %58 = vector.broadcast %57 : vector<2x16x1xf32> to vector<2x16x16xf32>
    %59 = arith.mulf %54, %58 : vector<2x16x16xf32>
    "tpu.trace_start"() <{level = 10 : i32, message = "bqk,bkd->bqd"}> : () -> ()
    %cst_22 = arith.constant dense<0.000000e+00> : vector<2x16x16xf32>
    %60 = tpu.matmul %59, %44, %cst_22 {dimension_numbers = #tpu.dot_dimension_numbers<[2], [1], [1], [2], [0, 0, 0, 1, 1, 2], [0], [0]>} : vector<2x16x16xf32>, vector<2x16x16xf32>, vector<2x16x16xf32> -> vector<2x16x16xf32>
    "tpu.trace_stop"() : () -> ()
    %61 = vector.shape_cast %60 : vector<2x16x16xf32> to vector<32x16xf32>
    %c0_23 = arith.constant 0 : index
    %c16 = arith.constant 16 : index
    %62 = vector.load %arg12[%c0_23, %c16] : memref<32x64xf32, #tpu.memory_space<vmem>>, vector<32x16xf32>
    tpu.vector_store %arg12[%c0_23, %c16], %61 {strides = array<i32>} : memref<32x64xf32, #tpu.memory_space<vmem>>, vector<32x16xf32>,
    %63 = vector.extract_strided_slice %16 {offsets = [0, 0, 32], sizes = [2, 16, 16], strides = [1, 1, 1]} : vector<2x16x64xf32> to vector<2x16x16xf32>
    %64 = vector.extract_strided_slice %18 {offsets = [0, 0, 32], sizes = [2, 16, 16], strides = [1, 1, 1]} : vector<2x16x64xf32> to vector<2x16x16xf32>
    %65 = vector.extract_strided_slice %20 {offsets = [0, 0, 32], sizes = [2, 16, 16], strides = [1, 1, 1]} : vector<2x16x64xf32> to vector<2x16x16xf32>
    "tpu.trace_start"() <{level = 10 : i32, message = "bqd,bkd->bqk"}> : () -> ()
    %cst_24 = arith.constant dense<0.000000e+00> : vector<2x16x16xf32>
    %66 = tpu.matmul %63, %64, %cst_24 {dimension_numbers = #tpu.dot_dimension_numbers<[2], [2], [1], [1], [0, 0, 0, 1, 1, 1], [0], [0]>} : vector<2x16x16xf32>, vector<2x16x16xf32>, vector<2x16x16xf32> -> vector<2x16x16xf32>
    "tpu.trace_stop"() : () -> ()
    %cst_25 = arith.constant 2.500000e-01 : f32
    %67 = vector.broadcast %cst_25 : f32 to vector<2x16x16xf32>
    %68 = arith.mulf %66, %67 : vector<2x16x16xf32>
    %69 = vector.broadcast %2 : vector<2x1x16xf32> to vector<2x16x16xf32>
    %70 = arith.addf %68, %69 : vector<2x16x16xf32>
    %cst_26 = arith.constant dense<0xFF800000> : vector<2x16xf32>
    %71 = vector.multi_reduction <maximumf>, %70, %cst_26 [2] : vector<2x16x16xf32> to vector<2x16xf32>
    %72 = vector.shape_cast %71 : vector<2x16xf32> to vector<2x16x1xf32>
    %73 = vector.broadcast %72 : vector<2x16x1xf32> to vector<2x16x16xf32>
    %74 = arith.subf %70, %73 : vector<2x16x16xf32>
    %75 = math.exp %74 : vector<2x16x16xf32>
    %cst_27 = arith.constant dense<0.000000e+00> : vector<2x16xf32>
    %76 = vector.multi_reduction <add>, %75, %cst_27 [2] : vector<2x16x16xf32> to vector<2x16xf32>
    %77 = vector.shape_cast %76 : vector<2x16xf32> to vector<2x16x1xf32>
    %78 = tpu.reciprocal %77 {approx = true} : vector<2x16x1xf32> -> vector<2x16x1xf32>
    %79 = vector.broadcast %78 : vector<2x16x1xf32> to vector<2x16x16xf32>
    %80 = arith.mulf %75, %79 : vector<2x16x16xf32>
    "tpu.trace_start"() <{level = 10 : i32, message = "bqk,bkd->bqd"}> : () -> ()
    %cst_28 = arith.constant dense<0.000000e+00> : vector<2x16x16xf32>
    %81 = tpu.matmul %80, %65, %cst_28 {dimension_numbers = #tpu.dot_dimension_numbers<[2], [1], [1], [2], [0, 0, 0, 1, 1, 2], [0], [0]>} : vector<2x16x16xf32>, vector<2x16x16xf32>, vector<2x16x16xf32> -> vector<2x16x16xf32>
    "tpu.trace_stop"() : () -> ()
    %82 = vector.shape_cast %81 : vector<2x16x16xf32> to vector<32x16xf32>
    %c0_29 = arith.constant 0 : index
    %c32 = arith.constant 32 : index
    %83 = vector.load %arg12[%c0_29, %c32] : memref<32x64xf32, #tpu.memory_space<vmem>>, vector<32x16xf32>
    tpu.vector_store %arg12[%c0_29, %c32], %82 {strides = array<i32>} : memref<32x64xf32, #tpu.memory_space<vmem>>, vector<32x16xf32>,
    %84 = vector.extract_strided_slice %16 {offsets = [0, 0, 48], sizes = [2, 16, 16], strides = [1, 1, 1]} : vector<2x16x64xf32> to vector<2x16x16xf32>
    %85 = vector.extract_strided_slice %18 {offsets = [0, 0, 48], sizes = [2, 16, 16], strides = [1, 1, 1]} : vector<2x16x64xf32> to vector<2x16x16xf32>
    %86 = vector.extract_strided_slice %20 {offsets = [0, 0, 48], sizes = [2, 16, 16], strides = [1, 1, 1]} : vector<2x16x64xf32> to vector<2x16x16xf32>
    "tpu.trace_start"() <{level = 10 : i32, message = "bqd,bkd->bqk"}> : () -> ()
    %cst_30 = arith.constant dense<0.000000e+00> : vector<2x16x16xf32>
    %87 = tpu.matmul %84, %85, %cst_30 {dimension_numbers = #tpu.dot_dimension_numbers<[2], [2], [1], [1], [0, 0, 0, 1, 1, 1], [0], [0]>} : vector<2x16x16xf32>, vector<2x16x16xf32>, vector<2x16x16xf32> -> vector<2x16x16xf32>
    "tpu.trace_stop"() : () -> ()
    %cst_31 = arith.constant 2.500000e-01 : f32
    %88 = vector.broadcast %cst_31 : f32 to vector<2x16x16xf32>
    %89 = arith.mulf %87, %88 : vector<2x16x16xf32>
    %90 = vector.broadcast %2 : vector<2x1x16xf32> to vector<2x16x16xf32>
    %91 = arith.addf %89, %90 : vector<2x16x16xf32>
    %cst_32 = arith.constant dense<0xFF800000> : vector<2x16xf32>
    %92 = vector.multi_reduction <maximumf>, %91, %cst_32 [2] : vector<2x16x16xf32> to vector<2x16xf32>
    %93 = vector.shape_cast %92 : vector<2x16xf32> to vector<2x16x1xf32>
    %94 = vector.broadcast %93 : vector<2x16x1xf32> to vector<2x16x16xf32>
    %95 = arith.subf %91, %94 : vector<2x16x16xf32>
    %96 = math.exp %95 : vector<2x16x16xf32>
    %cst_33 = arith.constant dense<0.000000e+00> : vector<2x16xf32>
    %97 = vector.multi_reduction <add>, %96, %cst_33 [2] : vector<2x16x16xf32> to vector<2x16xf32>
    %98 = vector.shape_cast %97 : vector<2x16xf32> to vector<2x16x1xf32>
    %99 = tpu.reciprocal %98 {approx = true} : vector<2x16x1xf32> -> vector<2x16x1xf32>
    %100 = vector.broadcast %99 : vector<2x16x1xf32> to vector<2x16x16xf32>
    %101 = arith.mulf %96, %100 : vector<2x16x16xf32>
    "tpu.trace_start"() <{level = 10 : i32, message = "bqk,bkd->bqd"}> : () -> ()
    %cst_34 = arith.constant dense<0.000000e+00> : vector<2x16x16xf32>
    %102 = tpu.matmul %101, %86, %cst_34 {dimension_numbers = #tpu.dot_dimension_numbers<[2], [1], [1], [2], [0, 0, 0, 1, 1, 2], [0], [0]>} : vector<2x16x16xf32>, vector<2x16x16xf32>, vector<2x16x16xf32> -> vector<2x16x16xf32>
    "tpu.trace_stop"() : () -> ()
    %103 = vector.shape_cast %102 : vector<2x16x16xf32> to vector<32x16xf32>
    %c0_35 = arith.constant 0 : index
    %c48 = arith.constant 48 : index
    %104 = vector.load %arg12[%c0_35, %c48] : memref<32x64xf32, #tpu.memory_space<vmem>>, vector<32x16xf32>
    tpu.vector_store %arg12[%c0_35, %c48], %103 {strides = array<i32>} : memref<32x64xf32, #tpu.memory_space<vmem>>, vector<32x16xf32>,
    %c0_36 = arith.constant 0 : index
    %c0_37 = arith.constant 0 : index
    %105 = vector.load %arg12[%c0_36, %c0_37] : memref<32x64xf32, #tpu.memory_space<vmem>>, vector<32x64xf32>
    %c0_38 = arith.constant 0 : index
    %c0_39 = arith.constant 0 : index
    %106 = vector.load %arg5[%c0_38, %c0_39] : memref<64x64xf32, #tpu.memory_space<vmem>>, vector<64x64xf32>
    %cst_40 = arith.constant dense<0.000000e+00> : vector<32x64xf32>
    %107 = tpu.matmul %105, %106, %cst_40 {dimension_numbers = #tpu.dot_dimension_numbers<[1], [0], [0], [1], [0, 0, 1, 1], [], []>} : vector<32x64xf32>, vector<64x64xf32>, vector<32x64xf32> -> vector<32x64xf32>
    %108 = vector.broadcast %4 : vector<1x64xf32> to vector<32x64xf32>
    %109 = arith.addf %107, %108 : vector<32x64xf32>
    %110 = arith.addf %1, %109 : vector<32x64xf32>
    %cst_41 = arith.constant dense<0.000000e+00> : vector<32xf32>
    %111 = vector.multi_reduction <add>, %110, %cst_41 [1] : vector<32x64xf32> to vector<32xf32>
    %112 = vector.shape_cast %111 : vector<32xf32> to vector<32x1xf32>
    %cst_42 = arith.constant 6.400000e+01 : f32
    %113 = vector.broadcast %cst_42 : f32 to vector<32x1xf32>
    %114 = arith.divf %112, %113 : vector<32x1xf32>
    %115 = vector.broadcast %114 : vector<32x1xf32> to vector<32x64xf32>
    %116 = arith.subf %110, %115 : vector<32x64xf32>
    %117 = arith.mulf %116, %116 : vector<32x64xf32>
    %cst_43 = arith.constant dense<0.000000e+00> : vector<32xf32>
    %118 = vector.multi_reduction <add>, %117, %cst_43 [1] : vector<32x64xf32> to vector<32xf32>
    %119 = vector.shape_cast %118 : vector<32xf32> to vector<32x1xf32>
    %cst_44 = arith.constant 6.400000e+01 : f32
    %120 = vector.broadcast %cst_44 : f32 to vector<32x1xf32>
    %121 = arith.divf %119, %120 : vector<32x1xf32>
    %122 = vector.broadcast %114 : vector<32x1xf32> to vector<32x64xf32>
    %123 = arith.subf %110, %122 : vector<32x64xf32>
    %cst_45 = arith.constant 9.99999996E-13 : f32
    %124 = vector.broadcast %cst_45 : f32 to vector<32x1xf32>
    %125 = arith.addf %121, %124 : vector<32x1xf32>
    %126 = math.rsqrt %125 : vector<32x1xf32>
    %127 = vector.broadcast %126 : vector<32x1xf32> to vector<32x64xf32>
    %128 = arith.mulf %123, %127 : vector<32x64xf32>
    %129 = vector.broadcast %5 : vector<1x64xf32> to vector<32x64xf32>
    %130 = arith.mulf %128, %129 : vector<32x64xf32>
    %131 = vector.broadcast %6 : vector<1x64xf32> to vector<32x64xf32>
    %132 = arith.addf %130, %131 : vector<32x64xf32>
    %c0_46 = arith.constant 0 : index
    %c0_47 = arith.constant 0 : index
    %133 = vector.load %arg6[%c0_46, %c0_47] : memref<64x128xf32, #tpu.memory_space<vmem>>, vector<64x128xf32>
    %cst_48 = arith.constant dense<0.000000e+00> : vector<32x128xf32>
    %134 = tpu.matmul %132, %133, %cst_48 {dimension_numbers = #tpu.dot_dimension_numbers<[1], [0], [0], [1], [0, 0, 1, 1], [], []>} : vector<32x64xf32>, vector<64x128xf32>, vector<32x128xf32> -> vector<32x128xf32>
    %c0_49 = arith.constant 0 : index
    %c0_50 = arith.constant 0 : index
    %135 = vector.load %arg9[%c0_49, %c0_50] : memref<1x128xf32, #tpu.memory_space<vmem>>, vector<1x128xf32>
    %136 = vector.broadcast %135 : vector<1x128xf32> to vector<32x128xf32>
    %137 = arith.addf %134, %136 : vector<32x128xf32>
    %138 = arith.mulf %137, %137 : vector<32x128xf32>
    %139 = arith.mulf %137, %138 : vector<32x128xf32>
    %cst_51 = arith.constant 4.471500e-02 : f32
    %140 = vector.broadcast %cst_51 : f32 to vector<32x128xf32>
    %141 = arith.mulf %140, %139 : vector<32x128xf32>
    %142 = arith.addf %137, %141 : vector<32x128xf32>
    %cst_52 = arith.constant 0.797884583 : f32
    %143 = vector.broadcast %cst_52 : f32 to vector<32x128xf32>
    %144 = arith.mulf %143, %142 : vector<32x128xf32>
    %145 = math.tanh %144 : vector<32x128xf32>
    %cst_53 = arith.constant 1.000000e+00 : f32
    %146 = vector.broadcast %cst_53 : f32 to vector<32x128xf32>
    %147 = arith.addf %146, %145 : vector<32x128xf32>
    %cst_54 = arith.constant 5.000000e-01 : f32
    %148 = vector.broadcast %cst_54 : f32 to vector<32x128xf32>
    %149 = arith.mulf %148, %147 : vector<32x128xf32>
    %150 = arith.mulf %137, %149 : vector<32x128xf32>
    %c0_55 = arith.constant 0 : index
    %c0_56 = arith.constant 0 : index
    %151 = vector.load %arg7[%c0_55, %c0_56] : memref<128x64xf32, #tpu.memory_space<vmem>>, vector<128x64xf32>
    %cst_57 = arith.constant dense<0.000000e+00> : vector<32x64xf32>
    %152 = tpu.matmul %150, %151, %cst_57 {dimension_numbers = #tpu.dot_dimension_numbers<[1], [0], [0], [1], [0, 0, 1, 1], [], []>} : vector<32x128xf32>, vector<128x64xf32>, vector<32x64xf32> -> vector<32x64xf32>
    %153 = vector.broadcast %7 : vector<1x64xf32> to vector<32x64xf32>
    %154 = arith.addf %152, %153 : vector<32x64xf32>
    %155 = arith.addf %132, %154 : vector<32x64xf32>
    %cst_58 = arith.constant dense<0.000000e+00> : vector<32xf32>
    %156 = vector.multi_reduction <add>, %155, %cst_58 [1] : vector<32x64xf32> to vector<32xf32>
    %157 = vector.shape_cast %156 : vector<32xf32> to vector<32x1xf32>
    %cst_59 = arith.constant 6.400000e+01 : f32
    %158 = vector.broadcast %cst_59 : f32 to vector<32x1xf32>
    %159 = arith.divf %157, %158 : vector<32x1xf32>
    %160 = vector.broadcast %159 : vector<32x1xf32> to vector<32x64xf32>
    %161 = arith.subf %155, %160 : vector<32x64xf32>
    %162 = arith.mulf %161, %161 : vector<32x64xf32>
    %cst_60 = arith.constant dense<0.000000e+00> : vector<32xf32>
    %163 = vector.multi_reduction <add>, %162, %cst_60 [1] : vector<32x64xf32> to vector<32xf32>
    %164 = vector.shape_cast %163 : vector<32xf32> to vector<32x1xf32>
    %cst_61 = arith.constant 6.400000e+01 : f32
    %165 = vector.broadcast %cst_61 : f32 to vector<32x1xf32>
    %166 = arith.divf %164, %165 : vector<32x1xf32>
    %167 = vector.broadcast %159 : vector<32x1xf32> to vector<32x64xf32>
    %168 = arith.subf %155, %167 : vector<32x64xf32>
    %cst_62 = arith.constant 9.99999996E-13 : f32
    %169 = vector.broadcast %cst_62 : f32 to vector<32x1xf32>
    %170 = arith.addf %166, %169 : vector<32x1xf32>
    %171 = math.rsqrt %170 : vector<32x1xf32>
    %172 = vector.broadcast %171 : vector<32x1xf32> to vector<32x64xf32>
    %173 = arith.mulf %168, %172 : vector<32x64xf32>
    %174 = vector.broadcast %8 : vector<1x64xf32> to vector<32x64xf32>
    %175 = arith.mulf %173, %174 : vector<32x64xf32>
    %176 = vector.broadcast %9 : vector<1x64xf32> to vector<32x64xf32>
    %177 = arith.addf %175, %176 : vector<32x64xf32>
    %c0_63 = arith.constant 0 : index
    %c0_64 = arith.constant 0 : index
    %c0_65 = arith.constant 0 : index
    %178 = vector.load %arg3[%c0_63, %c0_64, %c0_65] : memref<2x4x16xf32, #tpu.memory_space<vmem>>, vector<2x4x16xf32>
    %cst_66 = arith.constant dense<0.000000e+00> : vector<2x4xf32>
    %179 = vector.multi_reduction <add>, %178, %cst_66 [2] : vector<2x4x16xf32> to vector<2x4xf32>
    %180 = vector.shape_cast %179 : vector<2x4xf32> to vector<2x4x1xf32>
    %181 = vector.shape_cast %177 : vector<32x64xf32> to vector<2x16x64xf32>
    "tpu.trace_start"() <{level = 10 : i32, message = "bws,bsh->bwh"}> : () -> ()
    %cst_67 = arith.constant dense<0.000000e+00> : vector<2x4x64xf32>
    %182 = tpu.matmul %178, %181, %cst_67 {dimension_numbers = #tpu.dot_dimension_numbers<[2], [1], [1], [2], [0, 0, 0, 1, 1, 2], [0], [0]>} : vector<2x4x16xf32>, vector<2x16x64xf32>, vector<2x4x64xf32> -> vector<2x4x64xf32>
    "tpu.trace_stop"() : () -> ()
    %cst_68 = arith.constant 1.000000e+00 : f32
    %183 = vector.broadcast %cst_68 : f32 to vector<2x4x1xf32>
    %184 = arith.maximumf %180, %183 : vector<2x4x1xf32>
    %185 = tpu.reciprocal %184 {approx = true} : vector<2x4x1xf32> -> vector<2x4x1xf32>
    %186 = vector.broadcast %185 : vector<2x4x1xf32> to vector<2x4x64xf32>
    %187 = arith.mulf %182, %186 : vector<2x4x64xf32>
    %c0_69 = arith.constant 0 : index
    %c0_70 = arith.constant 0 : index
    %c0_71 = arith.constant 0 : index
    %188 = vector.load %arg11[%c0_69, %c0_70, %c0_71] : memref<2x4x64xf32, #tpu.memory_space<vmem>>, vector<2x4x64xf32>
    tpu.vector_store %arg11[%c0_69, %c0_70, %c0_71], %187 {strides = array<i32>} : memref<2x4x64xf32, #tpu.memory_space<vmem>>, vector<2x4x64xf32>,
    return
  }
  func.func @transform_0(%arg0: i32) -> (i32, i32, i32) {
    %c0_i32 = arith.constant 0 : i32
    %c0_i32_0 = arith.constant 0 : i32
    %c0_i32_1 = arith.constant 0 : i32
    %c0_i32_2 = arith.constant 0 : i32
    return %c0_i32, %c0_i32_0, %c0_i32_1 : i32, i32, i32
  }
  func.func @transform_1(%arg0: i32) -> (i32, i32, i32) {
    %c0_i32 = arith.constant 0 : i32
    %c0_i32_0 = arith.constant 0 : i32
    %c0_i32_1 = arith.constant 0 : i32
    %c0_i32_2 = arith.constant 0 : i32
    return %c0_i32, %c0_i32_0, %c0_i32_1 : i32, i32, i32
  }
  func.func @transform_2(%arg0: i32) -> (i32, i32, i32) {
    %c0_i32 = arith.constant 0 : i32
    %c0_i32_0 = arith.constant 0 : i32
    %c0_i32_1 = arith.constant 0 : i32
    %c0_i32_2 = arith.constant 0 : i32
    return %c0_i32, %c0_i32_0, %c0_i32_1 : i32, i32, i32
  }
  func.func @transform_3(%arg0: i32) -> (i32, i32) {
    %c0_i32 = arith.constant 0 : i32
    %c0_i32_0 = arith.constant 0 : i32
    %c0_i32_1 = arith.constant 0 : i32
    return %c0_i32, %c0_i32_0 : i32, i32
  }
  func.func @transform_4(%arg0: i32) -> (i32, i32) {
    %c0_i32 = arith.constant 0 : i32
    %c0_i32_0 = arith.constant 0 : i32
    %c0_i32_1 = arith.constant 0 : i32
    return %c0_i32, %c0_i32_0 : i32, i32
  }
  func.func @transform_5(%arg0: i32) -> (i32, i32) {
    %c0_i32 = arith.constant 0 : i32
    %c0_i32_0 = arith.constant 0 : i32
    %c0_i32_1 = arith.constant 0 : i32
    return %c0_i32, %c0_i32_0 : i32, i32
  }
  func.func @transform_6(%arg0: i32) -> (i32, i32) {
    %c0_i32 = arith.constant 0 : i32
    %c0_i32_0 = arith.constant 0 : i32
    %c0_i32_1 = arith.constant 0 : i32
    return %c0_i32, %c0_i32_0 : i32, i32
  }
  func.func @transform_7(%arg0: i32) -> (i32, i32) {
    %c0_i32 = arith.constant 0 : i32
    %c0_i32_0 = arith.constant 0 : i32
    %c0_i32_1 = arith.constant 0 : i32
    return %c0_i32, %c0_i32_0 : i32, i32
  }
  func.func @transform_8(%arg0: i32) -> (i32, i32) {
    %c0_i32 = arith.constant 0 : i32
    %c0_i32_0 = arith.constant 0 : i32
    %c0_i32_1 = arith.constant 0 : i32
    return %c0_i32, %c0_i32_0 : i32, i32
  }
  func.func @transform_9(%arg0: i32) -> (i32, i32) {
    %c0_i32 = arith.constant 0 : i32
    %c0_i32_0 = arith.constant 0 : i32
    %c0_i32_1 = arith.constant 0 : i32
    return %c0_i32, %c0_i32_0 : i32, i32
  }
  func.func @transform_10(%arg0: i32) -> (i32, i32, i32) {
    %c0_i32 = arith.constant 0 : i32
    %c0_i32_0 = arith.constant 0 : i32
    %c0_i32_1 = arith.constant 0 : i32
    %c0_i32_2 = arith.constant 0 : i32
    return %c0_i32, %c0_i32_0, %c0_i32_1 : i32, i32, i32
  }
}

</mosaic_0001>

<llo_original>
// kernel: forward.1
$region0: #{forward.1}
  #allocation0 [shape = 'u32[]', space=smem, size = 0x4, offset = 0x4, fixed_abs, tag = 'smem constant byte address 0x4 - core index']
  #allocation1 [shape = 'u32[144,128]{1,0:T(1,128)}', space=vmem, size = 0x12000, scoped, tag = 'internal scratch']
  #allocation2 [shape = 'f32[32,64]{1,0:T(8,128)}', space=vmem, size = 0x4000, scoped, tag = 'scratch operand']
  %s0 = inlined_call_operand.vmem [shape: f32[2,16,64], index: 0, kind: input, shape index: {}]
  %s1 = inlined_call_operand.vmem [shape: f32[2,1,16], index: 1, kind: input, shape index: {}]
  %s2 = inlined_call_operand.vmem [shape: f32[2,4,16], index: 2, kind: input, shape index: {}]
  %s3 = inlined_call_operand.vmem [shape: f32[64,192], index: 3, kind: input, shape index: {}]
  %s4 = inlined_call_operand.vmem [shape: f32[64,64], index: 4, kind: input, shape index: {}]
  %s5 = inlined_call_operand.vmem [shape: f32[64,128], index: 5, kind: input, shape index: {}]
  %s6 = inlined_call_operand.vmem [shape: f32[128,64], index: 6, kind: input, shape index: {}]
  %s7 = inlined_call_operand.vmem [shape: f32[1,192], index: 7, kind: input, shape index: {}]
  %s8 = inlined_call_operand.vmem [shape: f32[1,128], index: 8, kind: input, shape index: {}]
  %s9 = inlined_call_operand.vmem [shape: f32[6,64], index: 9, kind: input, shape index: {}]
  %s10 = inlined_call_operand.hbm [shape: f32[2,4,64], index: 10, kind: output, shape index: {}]
  %s11 = sld [smem:[#allocation0]]
  $region50: #{forward.1} parent=0
    _
  %s13 = ssub.s32 1, %s11
  %s14 = scalar_select 0, %s13, %s11
  $region1: #{forward.1} parent=0
    #allocation3 [shape = 'u8[4096]{0}', space=vmem, size = 0x1000, scoped, tag = 'output window, operand 0, single buffered']
    #allocation4 [shape = 's32[1]{0}', space=sflag, size = 0x4, scoped, tag = 'scoped memory for forward.1']
    %15 = vsyncpa [#allocation4], 0
    // Predicated region
    $region2: #{forward.1} parent=1 // pred_check
      _
    $region3: #{forward.1} parent=1 // pred_check_branch
      %17 = sbr.rel (0) target = $region5
    $region4: #{forward.1} parent=1 // pred_region
      _
    $region5: #{forward.1} parent=1 // pred_fallthru
      _
    // Predicated region
    $region6: #{forward.1} parent=1 // pred_check
      _
    $region7: #{forward.1} parent=1 // pred_check_branch
      %19 = sbr.rel (0) target = $region9
    $region8: #{forward.1} parent=1 // pred_region
      _
    $region9: #{forward.1} parent=1 // pred_fallthru
      _
    // Predicated region
    $region10: #{forward.1} parent=1 // pred_check
      _
    $region11: #{forward.1} parent=1 // pred_check_branch
      %21 = sbr.rel (0) target = $region13
    $region12: #{forward.1} parent=1 // pred_region
      _
    $region13: #{forward.1} parent=1 // pred_fallthru
      _
    // Predicated region
    $region14: #{forward.1} parent=1 // pred_check
      _
    $region15: #{forward.1} parent=1 // pred_check_branch
      %23 = sbr.rel (0) target = $region17
    $region16: #{forward.1} parent=1 // pred_region
      _
    $region17: #{forward.1} parent=1 // pred_fallthru
      _
    // Predicated region
    $region18: #{forward.1} parent=1 // pred_check
      _
    $region19: #{forward.1} parent=1 // pred_check_branch
      %25 = sbr.rel (0) target = $region21
    $region20: #{forward.1} parent=1 // pred_region
      _
    $region21: #{forward.1} parent=1 // pred_fallthru
      _
    // Predicated region
    $region22: #{forward.1} parent=1 // pred_check
      _
    $region23: #{forward.1} parent=1 // pred_check_branch
      %27 = sbr.rel (0) target = $region25
    $region24: #{forward.1} parent=1 // pred_region
      _
    $region25: #{forward.1} parent=1 // pred_fallthru
      _
    // Predicated region
    $region26: #{forward.1} parent=1 // pred_check
      _
    $region27: #{forward.1} parent=1 // pred_check_branch
      %29 = sbr.rel (0) target = $region29
    $region28: #{forward.1} parent=1 // pred_region
      _
    $region29: #{forward.1} parent=1 // pred_fallthru
      _
    // Predicated region
    $region30: #{forward.1} parent=1 // pred_check
      _
    $region31: #{forward.1} parent=1 // pred_check_branch
      %31 = sbr.rel (0) target = $region33
    $region32: #{forward.1} parent=1 // pred_region
      _
    $region33: #{forward.1} parent=1 // pred_fallthru
      _
    // Predicated region
    $region34: #{forward.1} parent=1 // pred_check
      _
    $region35: #{forward.1} parent=1 // pred_check_branch
      %33 = sbr.rel (0) target = $region37
    $region36: #{forward.1} parent=1 // pred_region
      _
    $region37: #{forward.1} parent=1 // pred_fallthru
      _
    // Predicated region
    $region38: #{forward.1} parent=1 // pred_check
      _
    $region39: #{forward.1} parent=1 // pred_check_branch
      %35 = sbr.rel (0) target = $region41
    $region40: #{forward.1} parent=1 // pred_region
      _
    $region41: #{forward.1} parent=1 // pred_fallthru
      _
    %v36 = vld [vmem:[%s0] sm:$0xff]
    %v37 = vld [vmem:[%s0 + $0x8] sm:$0xff]
    %v38 = vld [vmem:[%s0 + $0x10] sm:$0xff]
    %v39 = vld [vmem:[%s0 + $0x18] sm:$0xff]
    %v40 = vld [vmem:[%s1] sm:$0x1]
    %v41 = vld [vmem:[%s1 + $0x1] sm:$0x1]
    %v42 = vld [vmem:[%s9] sm:$0x3f]
    %v43 = vld [vmem:[%s3] sm:$0xff]
    %v44 = vld [vmem:[%s3 + $0x8] sm:$0xff]
    %v45 = vld [vmem:[%s3 + $0x10] sm:$0xff]
    %v46 = vld [vmem:[%s3 + $0x18] sm:$0xff]
    %v47 = vld [vmem:[%s3 + $0x20] sm:$0xff]
    %v48 = vld [vmem:[%s3 + $0x28] sm:$0xff]
    %v49 = vld [vmem:[%s3 + $0x30] sm:$0xff]
    %v50 = vld [vmem:[%s3 + $0x38] sm:$0xff]
    %v51 = vld [vmem:[%s3 + $0x40] sm:$0xff]
    %v52 = vld [vmem:[%s3 + $0x48] sm:$0xff]
    %v53 = vld [vmem:[%s3 + $0x50] sm:$0xff]
    %v54 = vld [vmem:[%s3 + $0x58] sm:$0xff]
    %v55 = vld [vmem:[%s3 + $0x60] sm:$0xff]
    %v56 = vld [vmem:[%s3 + $0x68] sm:$0xff]
    %v57 = vld [vmem:[%s3 + $0x70] sm:$0xff]
    %v58 = vld [vmem:[%s3 + $0x78] sm:$0xff]
    %v59 = vld [vmem:[%s7] sm:$0x3]
    %v61 = vlaneseq
    %v62 = vshrl.u32 %v61, 7
    %v63 = vsub.s32 0, %v62
    %v64 = vrot.slane %v59, %v63
    %v65 = vlaneseq
    %v66 = vshrl.u32 %v65, 7
    %v67 = vsub.s32 1, %v66
    %v68 = vrot.slane %v59, %v67
    %vm71 = vcmask 523264
    %v73 = vsel %vm71, %v36, 0
    %v76 = vsel %vm71, %v37, 0
    %v79 = vsel %vm71, %v38, 0
    %v82 = vsel %vm71, %v39, 0
    %84 = vmatprep.subr.mxu0 %v44
    %85 = vmatpush1.msra.mxu0 %v43
    %86 = vmatprep.subr.mxu0 %v46
    %87 = vmatpush1.msra.mxu0 %v45
    %88 = vmatprep.subr.mxu0 %v48
    %89 = vmatpush1.msra.mxu0 %v47
    %90 = vmatprep.subr.mxu0 %v50
    %91 = vmatpush1.msra.mxu0 %v49
    %92 = vmatprep.subr.mxu0 %v52
    %93 = vmatpush1.msra.mxu0 %v51
    %94 = vmatprep.subr.mxu0 %v54
    %95 = vmatpush1.msra.mxu0 %v53
    %96 = vmatprep.subr.mxu0 %v56
    %97 = vmatpush1.msra.mxu0 %v55
    %98 = vmatprep.subr.mxu0 %v58
    %99 = vmatpush1.msra.mxu0 %v57
    %100 = vmatprep.subr.mxu0 0.0
    %101 = vmatpush1.msra.mxu0 0.0
    %102 = vmatprep.subr.mxu0 0.0
    %103 = vmatpush1.msra.mxu0 0.0
    %104 = vmatprep.subr.mxu0 0.0
    %105 = vmatpush1.msra.mxu0 0.0
    %106 = vmatprep.subr.mxu0 0.0
    %107 = vmatpush1.msra.mxu0 0.0
    %108 = vmatprep.subr.mxu0 0.0
    %109 = vmatpush1.msra.mxu0 0.0
    %110 = vmatprep.subr.mxu0 0.0
    %111 = vmatpush1.msra.mxu0 0.0
    %112 = vmatprep.subr.mxu0 0.0
    %113 = vmatpush1.msra.mxu0 0.0
    %114 = vmatprep.subr.mxu0 0.0
    %115 = vmatpush1.msra.mxu0 0.0
    %116 = vmatprep.subr.mxu0 0.0
    %117 = vmatpush1.msra.mxu0 0.0
    %118 = vmatprep.subr.mxu0 0.0
    %119 = vmatpush1.msra.mxu0 0.0
    %120 = vmatprep.subr.mxu0 0.0
    %121 = vmatpush1.msra.mxu0 0.0
    %122 = vmatprep.subr.mxu0 0.0
    %123 = vmatpush1.msra.mxu0 0.0
    %124 = vmatprep.subr.mxu0 0.0
    %125 = vmatpush1.msra.mxu0 0.0
    %126 = vmatprep.subr.mxu0 0.0
    %127 = vmatpush1.msra.mxu0 0.0
    %128 = vmatprep.subr.mxu0 0.0
    %129 = vmatpush1.msra.mxu0 0.0
    %130 = vmatprep.subr.mxu0 0.0
    %131 = vmatpush1.msra.mxu0 0.0
    %132 = vmatprep.subr.mxu0 0.0
    %133 = vmatpush1.msra.mxu0 0.0
    %134 = vmatprep.subr.mxu0 0.0
    %135 = vmatpush1.msra.mxu0 0.0
    %136 = vmatprep.subr.mxu0 0.0
    %137 = vmatpush1.msra.mxu0 0.0
    %138 = vmatprep.subr.mxu0 0.0
    %139 = vmatpush1.msra.mxu0 0.0
    %140 = vmatprep.subr.mxu0 0.0
    %141 = vmatpush1.msra.mxu0 0.0
    %142 = vmatprep.subr.mxu0 0.0
    %143 = vmatpush1.msra.mxu0 0.0
    %144 = vmatprep.subr.mxu0 0.0
    %145 = vmatpush1.msra.mxu0 0.0
    %146 = vmatprep.subr.mxu0 0.0
    %147 = vmatpush1.msra.mxu0 0.0
    %148 = vmatprep.mubr.f32.mxu0 0.0
    %149 = vmatmul.mubr.f32.gmra.mrb[0].mxu0 %v73
    %v150 = vpop.f32.mrb[0].mxu0
    %v151 = vadd.f32 %v64, %v150
    %v152 = vpop.f32.mrb[0].mxu0
    %v153 = vadd.f32 %v68, %v152
    %154 = vmatprep.mubr.f32.mxu0 0.0
    %155 = vmatmul.mubr.f32.gmra.mrb[0].mxu0 %v76
    %v156 = vpop.f32.mrb[0].mxu0
    %v157 = vadd.f32 %v64, %v156
    %v158 = vpop.f32.mrb[0].mxu0
    %v159 = vadd.f32 %v68, %v158
    %160 = vmatprep.mubr.f32.mxu0 0.0
    %161 = vmatmul.mubr.f32.gmra.mrb[0].mxu0 %v79
    %v162 = vpop.f32.mrb[0].mxu0
    %v163 = vadd.f32 %v64, %v162
    %v164 = vpop.f32.mrb[0].mxu0
    %v165 = vadd.f32 %v68, %v164
    %166 = vmatprep.mubr.f32.mxu0 0.0
    %167 = vmatmul.mubr.f32.gmra.mrb[0].mxu0 %v82
    %v168 = vpop.f32.mrb[0].mxu0
    %v169 = vadd.f32 %v64, %v168
    %v170 = vpop.f32.mrb[0].mxu0
    %v171 = vadd.f32 %v68, %v170
    %172 = vdwg.mxu0
    %175 = vrot.lane.b32.xlu0 %v151, 64
    %v176 = vpop.permute.xlu0 %175
    %177 = vrot.lane.b32.xlu0 %v157, 64
    %v178 = vpop.permute.xlu0 %177
    %vm179 = vcmask 130048
    %v180 = vsel %vm179, %v151, 0
    %v182 = vsel %vm179, %v157, 0
    %v184 = vsel %vm179, %v176, 0
    %v186 = vsel %vm179, %v178, 0
    %188 = vmatprep.subr.mxu0 0.0
    %189 = vmatpush1.xpose.msra.mxu0 %v184
    %190 = vmatprep.subr.mxu0 0.0
    %191 = vmatpush1.xpose.msra.mxu0 %v186
    %192 = vmatprep.subr.mxu0 0.0
    %193 = vmatpush1.xpose.msra.mxu0 0.0
    %194 = vmatprep.subr.mxu0 0.0
    %195 = vmatpush1.xpose.msra.mxu0 0.0
    %196 = vmatprep.subr.mxu0 0.0
    %197 = vmatpush1.xpose.msra.mxu0 0.0
    %198 = vmatprep.subr.mxu0 0.0
    %199 = vmatpush1.xpose.msra.mxu0 0.0
    %200 = vmatprep.subr.mxu0 0.0
    %201 = vmatpush1.xpose.msra.mxu0 0.0
    %202 = vmatprep.subr.mxu0 0.0
    %203 = vmatpush1.xpose.msra.mxu0 0.0
    %204 = vmatprep.subr.mxu0 0.0
    %205 = vmatpush1.xpose.msra.mxu0 0.0
    %206 = vmatprep.subr.mxu0 0.0
    %207 = vmatpush1.xpose.msra.mxu0 0.0
    %208 = vmatprep.subr.mxu0 0.0
    %209 = vmatpush1.xpose.msra.mxu0 0.0
    %210 = vmatprep.subr.mxu0 0.0
    %211 = vmatpush1.xpose.msra.mxu0 0.0
    %212 = vmatprep.subr.mxu0 0.0
    %213 = vmatpush1.xpose.msra.mxu0 0.0
    %214 = vmatprep.subr.mxu0 0.0
    %215 = vmatpush1.xpose.msra.mxu0 0.0
    %216 = vmatprep.subr.mxu0 0.0
    %217 = vmatpush1.xpose.msra.mxu0 0.0
    %218 = vmatprep.subr.mxu0 0.0
    %219 = vmatpush1.xpose.msra.mxu0 0.0
    %220 = vmatprep.subr.mxu0 0.0
    %221 = vmatpush1.xpose.msra.mxu0 0.0
    %222 = vmatprep.subr.mxu0 0.0
    %223 = vmatpush1.xpose.msra.mxu0 0.0
    %224 = vmatprep.subr.mxu0 0.0
    %225 = vmatpush1.xpose.msra.mxu0 0.0
    %226 = vmatprep.subr.mxu0 0.0
    %227 = vmatpush1.xpose.msra.mxu0 0.0
    %228 = vmatprep.subr.mxu0 0.0
    %229 = vmatpush1.xpose.msra.mxu0 0.0
    %230 = vmatprep.subr.mxu0 0.0
    %231 = vmatpush1.xpose.msra.mxu0 0.0
    %232 = vmatprep.subr.mxu0 0.0
    %233 = vmatpush1.xpose.msra.mxu0 0.0
    %234 = vmatprep.subr.mxu0 0.0
    %235 = vmatpush1.xpose.msra.mxu0 0.0
    %236 = vmatprep.subr.mxu0 0.0
    %237 = vmatpush1.xpose.msra.mxu0 0.0
    %238 = vmatprep.subr.mxu0 0.0
    %239 = vmatpush1.xpose.msra.mxu0 0.0
    %240 = vmatprep.subr.mxu0 0.0
    %241 = vmatpush1.xpose.msra.mxu0 0.0
    %242 = vmatprep.subr.mxu0 0.0
    %243 = vmatpush1.xpose.msra.mxu0 0.0
    %244 = vmatprep.subr.mxu0 0.0
    %245 = vmatpush1.xpose.msra.mxu0 0.0
    %246 = vmatprep.subr.mxu0 0.0
    %247 = vmatpush1.xpose.msra.mxu0 0.0
    %248 = vmatprep.subr.mxu0 0.0
    %249 = vmatpush1.xpose.msra.mxu0 0.0
    %250 = vmatprep.subr.mxu0 0.0
    %251 = vmatpush1.xpose.msra.mxu0 0.0
    %252 = vmatprep.mubr.f32.mxu0 0.0
    %253 = vmatmul.mubr.f32.gmra.mrb[0].mxu0 %v180
    %v254 = vpop.f32.mrb[0].mxu0
    %v255 = vadd.f32 0.0, %v254
    %v256 = vpop.f32.mrb[0].mxu0
    %257 = vmatprep.mubr.f32.mxu0 0.0
    %258 = vmatmul.mubr.f32.gmra.mrb[0].mxu0 %v182
    %v259 = vpop.f32.mrb[0].mxu0
    %v260 = vadd.f32 0.0, %v259
    %v261 = vpop.f32.mrb[0].mxu0
    %262 = vdwg.mxu0
    %265 = vrot.lane.b32.xlu0 %v163, 64
    %v266 = vpop.permute.xlu0 %265
    %267 = vrot.lane.b32.xlu0 %v169, 64
    %v268 = vpop.permute.xlu0 %267
    %v269 = vsel %vm179, %v163, 0
    %v271 = vsel %vm179, %v169, 0
    %v273 = vsel %vm179, %v266, 0
    %v275 = vsel %vm179, %v268, 0
    %277 = vmatprep.subr.mxu0 0.0
    %278 = vmatpush1.xpose.msra.mxu0 %v273
    %279 = vmatprep.subr.mxu0 0.0
    %280 = vmatpush1.xpose.msra.mxu0 %v275
    %281 = vmatprep.subr.mxu0 0.0
    %282 = vmatpush1.xpose.msra.mxu0 0.0
    %283 = vmatprep.subr.mxu0 0.0
    %284 = vmatpush1.xpose.msra.mxu0 0.0
    %285 = vmatprep.subr.mxu0 0.0
    %286 = vmatpush1.xpose.msra.mxu0 0.0
    %287 = vmatprep.subr.mxu0 0.0
    %288 = vmatpush1.xpose.msra.mxu0 0.0
    %289 = vmatprep.subr.mxu0 0.0
    %290 = vmatpush1.xpose.msra.mxu0 0.0
    %291 = vmatprep.subr.mxu0 0.0
    %292 = vmatpush1.xpose.msra.mxu0 0.0
    %293 = vmatprep.subr.mxu0 0.0
    %294 = vmatpush1.xpose.msra.mxu0 0.0
    %295 = vmatprep.subr.mxu0 0.0
    %296 = vmatpush1.xpose.msra.mxu0 0.0
    %297 = vmatprep.subr.mxu0 0.0
    %298 = vmatpush1.xpose.msra.mxu0 0.0
    %299 = vmatprep.subr.mxu0 0.0
    %300 = vmatpush1.xpose.msra.mxu0 0.0
    %301 = vmatprep.subr.mxu0 0.0
    %302 = vmatpush1.xpose.msra.mxu0 0.0
    %303 = vmatprep.subr.mxu0 0.0
    %304 = vmatpush1.xpose.msra.mxu0 0.0
    %305 = vmatprep.subr.mxu0 0.0
    %306 = vmatpush1.xpose.msra.mxu0 0.0
    %307 = vmatprep.subr.mxu0 0.0
    %308 = vmatpush1.xpose.msra.mxu0 0.0
    %309 = vmatprep.subr.mxu0 0.0
    %310 = vmatpush1.xpose.msra.mxu0 0.0
    %311 = vmatprep.subr.mxu0 0.0
    %312 = vmatpush1.xpose.msra.mxu0 0.0
    %313 = vmatprep.subr.mxu0 0.0
    %314 = vmatpush1.xpose.msra.mxu0 0.0
    %315 = vmatprep.subr.mxu0 0.0
    %316 = vmatpush1.xpose.msra.mxu0 0.0
    %317 = vmatprep.subr.mxu0 0.0
    %318 = vmatpush1.xpose.msra.mxu0 0.0
    %319 = vmatprep.subr.mxu0 0.0
    %320 = vmatpush1.xpose.msra.mxu0 0.0
    %321 = vmatprep.subr.mxu0 0.0
    %322 = vmatpush1.xpose.msra.mxu0 0.0
    %323 = vmatprep.subr.mxu0 0.0
    %324 = vmatpush1.xpose.msra.mxu0 0.0
    %325 = vmatprep.subr.mxu0 0.0
    %326 = vmatpush1.xpose.msra.mxu0 0.0
    %327 = vmatprep.subr.mxu0 0.0
    %328 = vmatpush1.xpose.msra.mxu0 0.0
    %329 = vmatprep.subr.mxu0 0.0
    %330 = vmatpush1.xpose.msra.mxu0 0.0
    %331 = vmatprep.subr.mxu0 0.0
    %332 = vmatpush1.xpose.msra.mxu0 0.0
    %333 = vmatprep.subr.mxu0 0.0
    %334 = vmatpush1.xpose.msra.mxu0 0.0
    %335 = vmatprep.subr.mxu0 0.0
    %336 = vmatpush1.xpose.msra.mxu0 0.0
    %337 = vmatprep.subr.mxu0 0.0
    %338 = vmatpush1.xpose.msra.mxu0 0.0
    %339 = vmatprep.subr.mxu0 0.0
    %340 = vmatpush1.xpose.msra.mxu0 0.0
    %341 = vmatprep.mubr.f32.mxu0 0.0
    %342 = vmatmul.mubr.f32.gmra.mrb[0].mxu0 %v269
    %v343 = vpop.f32.mrb[0].mxu0
    %v344 = vadd.f32 0.0, %v343
    %v345 = vpop.f32.mrb[0].mxu0
    %346 = vmatprep.mubr.f32.mxu0 0.0
    %347 = vmatmul.mubr.f32.gmra.mrb[0].mxu0 %v271
    %v348 = vpop.f32.mrb[0].mxu0
    %v349 = vadd.f32 0.0, %v348
    %v350 = vpop.f32.mrb[0].mxu0
    %351 = vdwg.mxu0
    %v352 = vmul.f32 %v255, 0.25
    %v353 = vmul.f32 %v260, 0.25
    %v354 = vmul.f32 %v344, 0.25
    %v355 = vmul.f32 %v349, 0.25
    %v358 = vlaneseq
    %v359 = vshrl.u32 %v358, 7
    %v360 = vsub.s32 0, %v359
    %v361 = vrot.slane %v40, %v360
    %v362 = vlaneseq
    %v363 = vshrl.u32 %v362, 7
    %v364 = vsub.s32 0, %v363
    %v365 = vrot.slane %v41, %v364
    %v368 = vadd.f32 %v352, %v361
    %v369 = vadd.f32 %v353, %v361
    %v370 = vadd.f32 %v354, %v365
    %v371 = vadd.f32 %v355, %v365
    %v372 = vsel %vm179, %v368, -inf
    %373 = vmax.xlane.f32.xlu0 %v372
    %v374 = vpop.xlane.xlu0 %373
    %v375 = vsel %vm179, %v369, -inf
    %376 = vmax.xlane.f32.xlu0 %v375
    %v377 = vpop.xlane.xlu0 %376
    %v378 = vsel %vm179, %v370, -inf
    %379 = vmax.xlane.f32.xlu0 %v378
    %v380 = vpop.xlane.xlu0 %379
    %v381 = vsel %vm179, %v371, -inf
    %382 = vmax.xlane.f32.xlu0 %v381
    %v383 = vpop.xlane.xlu0 %382
    %v384 = vsub.f32 %v368, %v374
    %v385 = vsub.f32 %v369, %v377
    %v386 = vsub.f32 %v370, %v380
    %v387 = vsub.f32 %v371, %v383
    %v388 = vmul.f32 %v384, 1.442695
    %v389 = vpow.pop %v388
    %v390 = vmul.f32 %v385, 1.442695
    %v391 = vpow.pop %v390
    %v392 = vmul.f32 %v386, 1.442695
    %v393 = vpow.pop %v392
    %v394 = vmul.f32 %v387, 1.442695
    %v395 = vpow.pop %v394
    %v396 = vsel %vm179, %v389, 0.0
    %397 = vadd.xlane.f32.xlu0 %v396
    %v398 = vpop.xlane.xlu0 %397
    %v399 = vsel %vm179, %v391, 0.0
    %400 = vadd.xlane.f32.xlu0 %v399
    %v401 = vpop.xlane.xlu0 %400
    %v402 = vsel %vm179, %v393, 0.0
    %403 = vadd.xlane.f32.xlu0 %v402
    %v404 = vpop.xlane.xlu0 %403
    %v405 = vsel %vm179, %v395, 0.0
    %406 = vadd.xlane.f32.xlu0 %v405
    %v407 = vpop.xlane.xlu0 %406
    %v408 = vrcp.pop %v398
    %v409 = vrcp.pop %v401
    %v410 = vrcp.pop %v404
    %v411 = vrcp.pop %v407
    %v412 = vmul.f32 %v389, %v408
    %v413 = vmul.f32 %v391, %v409
    %v414 = vmul.f32 %v393, %v410
    %v415 = vmul.f32 %v395, %v411
    %v417 = vsel %vm179, %v412, 0
    %v420 = vsel %vm179, %v413, 0
    %422 = vmatprep.subr.mxu0 0.0
    %423 = vmatpush1.msra.mxu0 %v153
    %424 = vmatprep.subr.mxu0 0.0
    %425 = vmatpush1.msra.mxu0 %v159
    %426 = vmatprep.subr.mxu0 0.0
    %427 = vmatpush1.msra.mxu0 0.0
    %428 = vmatprep.subr.mxu0 0.0
    %429 = vmatpush1.msra.mxu0 0.0
    %430 = vmatprep.subr.mxu0 0.0
    %431 = vmatpush1.msra.mxu0 0.0
    %432 = vmatprep.subr.mxu0 0.0
    %433 = vmatpush1.msra.mxu0 0.0
    %434 = vmatprep.subr.mxu0 0.0
    %435 = vmatpush1.msra.mxu0 0.0
    %436 = vmatprep.subr.mxu0 0.0
    %437 = vmatpush1.msra.mxu0 0.0
    %438 = vmatprep.subr.mxu0 0.0
    %439 = vmatpush1.msra.mxu0 0.0
    %440 = vmatprep.subr.mxu0 0.0
    %441 = vmatpush1.msra.mxu0 0.0
    %442 = vmatprep.subr.mxu0 0.0
    %443 = vmatpush1.msra.mxu0 0.0
    %444 = vmatprep.subr.mxu0 0.0
    %445 = vmatpush1.msra.mxu0 0.0
    %446 = vmatprep.subr.mxu0 0.0
    %447 = vmatpush1.msra.mxu0 0.0
    %448 = vmatprep.subr.mxu0 0.0
    %449 = vmatpush1.msra.mxu0 0.0
    %450 = vmatprep.subr.mxu0 0.0
    %451 = vmatpush1.msra.mxu0 0.0
    %452 = vmatprep.subr.mxu0 0.0
    %453 = vmatpush1.msra.mxu0 0.0
    %454 = vmatprep.subr.mxu0 0.0
    %455 = vmatpush1.msra.mxu0 0.0
    %456 = vmatprep.subr.mxu0 0.0
    %457 = vmatpush1.msra.mxu0 0.0
    %458 = vmatprep.subr.mxu0 0.0
    %459 = vmatpush1.msra.mxu0 0.0
    %460 = vmatprep.subr.mxu0 0.0
    %461 = vmatpush1.msra.mxu0 0.0
    %462 = vmatprep.subr.mxu0 0.0
    %463 = vmatpush1.msra.mxu0 0.0
    %464 = vmatprep.subr.mxu0 0.0
    %465 = vmatpush1.msra.mxu0 0.0
    %466 = vmatprep.subr.mxu0 0.0
    %467 = vmatpush1.msra.mxu0 0.0
    %468 = vmatprep.subr.mxu0 0.0
    %469 = vmatpush1.msra.mxu0 0.0
    %470 = vmatprep.subr.mxu0 0.0
    %471 = vmatpush1.msra.mxu0 0.0
    %472 = vmatprep.subr.mxu0 0.0
    %473 = vmatpush1.msra.mxu0 0.0
    %474 = vmatprep.subr.mxu0 0.0
    %475 = vmatpush1.msra.mxu0 0.0
    %476 = vmatprep.subr.mxu0 0.0
    %477 = vmatpush1.msra.mxu0 0.0
    %478 = vmatprep.subr.mxu0 0.0
    %479 = vmatpush1.msra.mxu0 0.0
    %480 = vmatprep.subr.mxu0 0.0
    %481 = vmatpush1.msra.mxu0 0.0
    %482 = vmatprep.subr.mxu0 0.0
    %483 = vmatpush1.msra.mxu0 0.0
    %484 = vmatprep.subr.mxu0 0.0
    %485 = vmatpush1.msra.mxu0 0.0
    %486 = vmatprep.mubr.f32.mxu0 0.0
    %487 = vmatmul.mubr.f32.gmra.mrb[0].mxu0 %v417
    %v488 = vpop.f32.mrb[0].mxu0
    %v489 = vadd.f32 0.0, %v488
    %v490 = vpop.f32.mrb[0].mxu0
    %491 = vmatprep.mubr.f32.mxu0 0.0
    %492 = vmatmul.mubr.f32.gmra.mrb[0].mxu0 %v420
    %v493 = vpop.f32.mrb[0].mxu0
    %v494 = vadd.f32 0.0, %v493
    %v495 = vpop.f32.mrb[0].mxu0
    %496 = vdwg.mxu0
    %v498 = vsel %vm179, %v414, 0
    %v501 = vsel %vm179, %v415, 0
    %503 = vmatprep.subr.mxu0 0.0
    %504 = vmatpush1.msra.mxu0 %v165
    %505 = vmatprep.subr.mxu0 0.0
    %506 = vmatpush1.msra.mxu0 %v171
    %507 = vmatprep.subr.mxu0 0.0
    %508 = vmatpush1.msra.mxu0 0.0
    %509 = vmatprep.subr.mxu0 0.0
    %510 = vmatpush1.msra.mxu0 0.0
    %511 = vmatprep.subr.mxu0 0.0
    %512 = vmatpush1.msra.mxu0 0.0
    %513 = vmatprep.subr.mxu0 0.0
    %514 = vmatpush1.msra.mxu0 0.0
    %515 = vmatprep.subr.mxu0 0.0
    %516 = vmatpush1.msra.mxu0 0.0
    %517 = vmatprep.subr.mxu0 0.0
    %518 = vmatpush1.msra.mxu0 0.0
    %519 = vmatprep.subr.mxu0 0.0
    %520 = vmatpush1.msra.mxu0 0.0
    %521 = vmatprep.subr.mxu0 0.0
    %522 = vmatpush1.msra.mxu0 0.0
    %523 = vmatprep.subr.mxu0 0.0
    %524 = vmatpush1.msra.mxu0 0.0
    %525 = vmatprep.subr.mxu0 0.0
    %526 = vmatpush1.msra.mxu0 0.0
    %527 = vmatprep.subr.mxu0 0.0
    %528 = vmatpush1.msra.mxu0 0.0
    %529 = vmatprep.subr.mxu0 0.0
    %530 = vmatpush1.msra.mxu0 0.0
    %531 = vmatprep.subr.mxu0 0.0
    %532 = vmatpush1.msra.mxu0 0.0
    %533 = vmatprep.subr.mxu0 0.0
    %534 = vmatpush1.msra.mxu0 0.0
    %535 = vmatprep.subr.mxu0 0.0
    %536 = vmatpush1.msra.mxu0 0.0
    %537 = vmatprep.subr.mxu0 0.0
    %538 = vmatpush1.msra.mxu0 0.0
    %539 = vmatprep.subr.mxu0 0.0
    %540 = vmatpush1.msra.mxu0 0.0
    %541 = vmatprep.subr.mxu0 0.0
    %542 = vmatpush1.msra.mxu0 0.0
    %543 = vmatprep.subr.mxu0 0.0
    %544 = vmatpush1.msra.mxu0 0.0
    %545 = vmatprep.subr.mxu0 0.0
    %546 = vmatpush1.msra.mxu0 0.0
    %547 = vmatprep.subr.mxu0 0.0
    %548 = vmatpush1.msra.mxu0 0.0
    %549 = vmatprep.subr.mxu0 0.0
    %550 = vmatpush1.msra.mxu0 0.0
    %551 = vmatprep.subr.mxu0 0.0
    %552 = vmatpush1.msra.mxu0 0.0
    %553 = vmatprep.subr.mxu0 0.0
    %554 = vmatpush1.msra.mxu0 0.0
    %555 = vmatprep.subr.mxu0 0.0
    %556 = vmatpush1.msra.mxu0 0.0
    %557 = vmatprep.subr.mxu0 0.0
    %558 = vmatpush1.msra.mxu0 0.0
    %559 = vmatprep.subr.mxu0 0.0
    %560 = vmatpush1.msra.mxu0 0.0
    %561 = vmatprep.subr.mxu0 0.0
    %562 = vmatpush1.msra.mxu0 0.0
    %563 = vmatprep.subr.mxu0 0.0
    %564 = vmatpush1.msra.mxu0 0.0
    %565 = vmatprep.subr.mxu0 0.0
    %566 = vmatpush1.msra.mxu0 0.0
    %567 = vmatprep.mubr.f32.mxu0 0.0
    %568 = vmatmul.mubr.f32.gmra.mrb[0].mxu0 %v498
    %v569 = vpop.f32.mrb[0].mxu0
    %v570 = vadd.f32 0.0, %v569
    %v571 = vpop.f32.mrb[0].mxu0
    %572 = vmatprep.mubr.f32.mxu0 0.0
    %573 = vmatmul.mubr.f32.gmra.mrb[0].mxu0 %v501
    %v574 = vpop.f32.mrb[0].mxu0
    %v575 = vadd.f32 0.0, %v574
    %v576 = vpop.f32.mrb[0].mxu0
    %577 = vdwg.mxu0
    %578 = vst.msk [vmem:[#allocation2] sm:$0xff] %vm179, %v489
    %579 = vst.msk [vmem:[#allocation2 + $0x8] sm:$0xff] %vm179, %v494
    %580 = vst.msk [vmem:[#allocation2 + $0x10] sm:$0xff] %vm179, %v570
    %581 = vst.msk [vmem:[#allocation2 + $0x18] sm:$0xff] %vm179, %v575
    %582 = vrot.lane.b32.xlu0 %v151, 112
    %v583 = vpop.permute.xlu0 %582
    %584 = vrot.lane.b32.xlu0 %v157, 112
    %v585 = vpop.permute.xlu0 %584
    %586 = vrot.lane.b32.xlu0 %v151, 48
    %v587 = vpop.permute.xlu0 %586
    %588 = vrot.lane.b32.xlu0 %v157, 48
    %v589 = vpop.permute.xlu0 %588
    %v590 = vsel %vm179, %v583, 0
    %v592 = vsel %vm179, %v585, 0
    %v594 = vsel %vm179, %v587, 0
    %v596 = vsel %vm179, %v589, 0
    %598 = vmatprep.subr.mxu0 0.0
    %599 = vmatpush1.xpose.msra.mxu0 %v594
    %600 = vmatprep.subr.mxu0 0.0
    %601 = vmatpush1.xpose.msra.mxu0 %v596
    %602 = vmatprep.subr.mxu0 0.0
    %603 = vmatpush1.xpose.msra.mxu0 0.0
    %604 = vmatprep.subr.mxu0 0.0
    %605 = vmatpush1.xpose.msra.mxu0 0.0
    %606 = vmatprep.subr.mxu0 0.0
    %607 = vmatpush1.xpose.msra.mxu0 0.0
    %608 = vmatprep.subr.mxu0 0.0
    %609 = vmatpush1.xpose.msra.mxu0 0.0
    %610 = vmatprep.subr.mxu0 0.0
    %611 = vmatpush1.xpose.msra.mxu0 0.0
    %612 = vmatprep.subr.mxu0 0.0
    %613 = vmatpush1.xpose.msra.mxu0 0.0
    %614 = vmatprep.subr.mxu0 0.0
    %615 = vmatpush1.xpose.msra.mxu0 0.0
    %616 = vmatprep.subr.mxu0 0.0
    %617 = vmatpush1.xpose.msra.mxu0 0.0
    %618 = vmatprep.subr.mxu0 0.0
    %619 = vmatpush1.xpose.msra.mxu0 0.0
    %620 = vmatprep.subr.mxu0 0.0
    %621 = vmatpush1.xpose.msra.mxu0 0.0
    %622 = vmatprep.subr.mxu0 0.0
    %623 = vmatpush1.xpose.msra.mxu0 0.0
    %624 = vmatprep.subr.mxu0 0.0
    %625 = vmatpush1.xpose.msra.mxu0 0.0
    %626 = vmatprep.subr.mxu0 0.0
    %627 = vmatpush1.xpose.msra.mxu0 0.0
    %628 = vmatprep.subr.mxu0 0.0
    %629 = vmatpush1.xpose.msra.mxu0 0.0
    %630 = vmatprep.subr.mxu0 0.0
    %631 = vmatpush1.xpose.msra.mxu0 0.0
    %632 = vmatprep.subr.mxu0 0.0
    %633 = vmatpush1.xpose.msra.mxu0 0.0
    %634 = vmatprep.subr.mxu0 0.0
    %635 = vmatpush1.xpose.msra.mxu0 0.0
    %636 = vmatprep.subr.mxu0 0.0
    %637 = vmatpush1.xpose.msra.mxu0 0.0
    %638 = vmatprep.subr.mxu0 0.0
    %639 = vmatpush1.xpose.msra.mxu0 0.0
    %640 = vmatprep.subr.mxu0 0.0
    %641 = vmatpush1.xpose.msra.mxu0 0.0
    %642 = vmatprep.subr.mxu0 0.0
    %643 = vmatpush1.xpose.msra.mxu0 0.0
    %644 = vmatprep.subr.mxu0 0.0
    %645 = vmatpush1.xpose.msra.mxu0 0.0
    %646 = vmatprep.subr.mxu0 0.0
    %647 = vmatpush1.xpose.msra.mxu0 0.0
    %648 = vmatprep.subr.mxu0 0.0
    %649 = vmatpush1.xpose.msra.mxu0 0.0
    %650 = vmatprep.subr.mxu0 0.0
    %651 = vmatpush1.xpose.msra.mxu0 0.0
    %652 = vmatprep.subr.mxu0 0.0
    %653 = vmatpush1.xpose.msra.mxu0 0.0
    %654 = vmatprep.subr.mxu0 0.0
    %655 = vmatpush1.xpose.msra.mxu0 0.0
    %656 = vmatprep.subr.mxu0 0.0
    %657 = vmatpush1.xpose.msra.mxu0 0.0
    %658 = vmatprep.subr.mxu0 0.0
    %659 = vmatpush1.xpose.msra.mxu0 0.0
    %660 = vmatprep.subr.mxu0 0.0
    %661 = vmatpush1.xpose.msra.mxu0 0.0
    %662 = vmatprep.mubr.f32.mxu0 0.0
    %663 = vmatmul.mubr.f32.gmra.mrb[0].mxu0 %v590
    %v664 = vpop.f32.mrb[0].mxu0
    %v665 = vadd.f32 0.0, %v664
    %v666 = vpop.f32.mrb[0].mxu0
    %667 = vmatprep.mubr.f32.mxu0 0.0
    %668 = vmatmul.mubr.f32.gmra.mrb[0].mxu0 %v592
    %v669 = vpop.f32.mrb[0].mxu0
    %v670 = vadd.f32 0.0, %v669
    %v671 = vpop.f32.mrb[0].mxu0
    %672 = vdwg.mxu0
    %673 = vrot.lane.b32.xlu0 %v163, 112
    %v674 = vpop.permute.xlu0 %673
    %675 = vrot.lane.b32.xlu0 %v169, 112
    %v676 = vpop.permute.xlu0 %675
    %677 = vrot.lane.b32.xlu0 %v163, 48
    %v678 = vpop.permute.xlu0 %677
    %679 = vrot.lane.b32.xlu0 %v169, 48
    %v680 = vpop.permute.xlu0 %679
    %v681 = vsel %vm179, %v674, 0
    %v683 = vsel %vm179, %v676, 0
    %v685 = vsel %vm179, %v678, 0
    %v687 = vsel %vm179, %v680, 0
    %689 = vmatprep.subr.mxu0 0.0
    %690 = vmatpush1.xpose.msra.mxu0 %v685
    %691 = vmatprep.subr.mxu0 0.0
    %692 = vmatpush1.xpose.msra.mxu0 %v687
    %693 = vmatprep.subr.mxu0 0.0
    %694 = vmatpush1.xpose.msra.mxu0 0.0
    %695 = vmatprep.subr.mxu0 0.0
    %696 = vmatpush1.xpose.msra.mxu0 0.0
    %697 = vmatprep.subr.mxu0 0.0
    %698 = vmatpush1.xpose.msra.mxu0 0.0
    %699 = vmatprep.subr.mxu0 0.0
    %700 = vmatpush1.xpose.msra.mxu0 0.0
    %701 = vmatprep.subr.mxu0 0.0
    %702 = vmatpush1.xpose.msra.mxu0 0.0
    %703 = vmatprep.subr.mxu0 0.0
    %704 = vmatpush1.xpose.msra.mxu0 0.0
    %705 = vmatprep.subr.mxu0 0.0
    %706 = vmatpush1.xpose.msra.mxu0 0.0
    %707 = vmatprep.subr.mxu0 0.0
    %708 = vmatpush1.xpose.msra.mxu0 0.0
    %709 = vmatprep.subr.mxu0 0.0
    %710 = vmatpush1.xpose.msra.mxu0 0.0
    %711 = vmatprep.subr.mxu0 0.0
    %712 = vmatpush1.xpose.msra.mxu0 0.0
    %713 = vmatprep.subr.mxu0 0.0
    %714 = vmatpush1.xpose.msra.mxu0 0.0
    %715 = vmatprep.subr.mxu0 0.0
    %716 = vmatpush1.xpose.msra.mxu0 0.0
    %717 = vmatprep.subr.mxu0 0.0
    %718 = vmatpush1.xpose.msra.mxu0 0.0
    %719 = vmatprep.subr.mxu0 0.0
    %720 = vmatpush1.xpose.msra.mxu0 0.0
    %721 = vmatprep.subr.mxu0 0.0
    %722 = vmatpush1.xpose.msra.mxu0 0.0
    %723 = vmatprep.subr.mxu0 0.0
    %724 = vmatpush1.xpose.msra.mxu0 0.0
    %725 = vmatprep.subr.mxu0 0.0
    %726 = vmatpush1.xpose.msra.mxu0 0.0
    %727 = vmatprep.subr.mxu0 0.0
    %728 = vmatpush1.xpose.msra.mxu0 0.0
    %729 = vmatprep.subr.mxu0 0.0
    %730 = vmatpush1.xpose.msra.mxu0 0.0
    %731 = vmatprep.subr.mxu0 0.0
    %732 = vmatpush1.xpose.msra.mxu0 0.0
    %733 = vmatprep.subr.mxu0 0.0
    %734 = vmatpush1.xpose.msra.mxu0 0.0
    %735 = vmatprep.subr.mxu0 0.0
    %736 = vmatpush1.xpose.msra.mxu0 0.0
    %737 = vmatprep.subr.mxu0 0.0
    %738 = vmatpush1.xpose.msra.mxu0 0.0
    %739 = vmatprep.subr.mxu0 0.0
    %740 = vmatpush1.xpose.msra.mxu0 0.0
    %741 = vmatprep.subr.mxu0 0.0
    %742 = vmatpush1.xpose.msra.mxu0 0.0
    %743 = vmatprep.subr.mxu0 0.0
    %744 = vmatpush1.xpose.msra.mxu0 0.0
    %745 = vmatprep.subr.mxu0 0.0
    %746 = vmatpush1.xpose.msra.mxu0 0.0
    %747 = vmatprep.subr.mxu0 0.0
    %748 = vmatpush1.xpose.msra.mxu0 0.0
    %749 = vmatprep.subr.mxu0 0.0
    %750 = vmatpush1.xpose.msra.mxu0 0.0
    %751 = vmatprep.subr.mxu0 0.0
    %752 = vmatpush1.xpose.msra.mxu0 0.0
    %753 = vmatprep.mubr.f32.mxu0 0.0
    %754 = vmatmul.mubr.f32.gmra.mrb[0].mxu0 %v681
    %v755 = vpop.f32.mrb[0].mxu0
    %v756 = vadd.f32 0.0, %v755
    %v757 = vpop.f32.mrb[0].mxu0
    %758 = vmatprep.mubr.f32.mxu0 0.0
    %759 = vmatmul.mubr.f32.gmra.mrb[0].mxu0 %v683
    %v760 = vpop.f32.mrb[0].mxu0
    %v761 = vadd.f32 0.0, %v760
    %v762 = vpop.f32.mrb[0].mxu0
    %763 = vdwg.mxu0
    %v764 = vmul.f32 %v665, 0.25
    %v765 = vmul.f32 %v670, 0.25
    %v766 = vmul.f32 %v756, 0.25
    %v767 = vmul.f32 %v761, 0.25
    %v768 = vadd.f32 %v764, %v361
    %v769 = vadd.f32 %v765, %v361
    %v770 = vadd.f32 %v766, %v365
    %v771 = vadd.f32 %v767, %v365
    %v772 = vsel %vm179, %v768, -inf
    %773 = vmax.xlane.f32.xlu0 %v772
    %v774 = vpop.xlane.xlu0 %773
    %v775 = vsel %vm179, %v769, -inf
    %776 = vmax.xlane.f32.xlu0 %v775
    %v777 = vpop.xlane.xlu0 %776
    %v778 = vsel %vm179, %v770, -inf
    %779 = vmax.xlane.f32.xlu0 %v778
    %v780 = vpop.xlane.xlu0 %779
    %v781 = vsel %vm179, %v771, -inf
    %782 = vmax.xlane.f32.xlu0 %v781
    %v783 = vpop.xlane.xlu0 %782
    %v784 = vsub.f32 %v768, %v774
    %v785 = vsub.f32 %v769, %v777
    %v786 = vsub.f32 %v770, %v780
    %v787 = vsub.f32 %v771, %v783
    %v788 = vmul.f32 %v784, 1.442695
    %v789 = vpow.pop %v788
    %v790 = vmul.f32 %v785, 1.442695
    %v791 = vpow.pop %v790
    %v792 = vmul.f32 %v786, 1.442695
    %v793 = vpow.pop %v792
    %v794 = vmul.f32 %v787, 1.442695
    %v795 = vpow.pop %v794
    %v796 = vsel %vm179, %v789, 0.0
    %797 = vadd.xlane.f32.xlu0 %v796
    %v798 = vpop.xlane.xlu0 %797
    %v799 = vsel %vm179, %v791, 0.0
    %800 = vadd.xlane.f32.xlu0 %v799
    %v801 = vpop.xlane.xlu0 %800
    %v802 = vsel %vm179, %v793, 0.0
    %803 = vadd.xlane.f32.xlu0 %v802
    %v804 = vpop.xlane.xlu0 %803
    %v805 = vsel %vm179, %v795, 0.0
    %806 = vadd.xlane.f32.xlu0 %v805
    %v807 = vpop.xlane.xlu0 %806
    %v808 = vrcp.pop %v798
    %v809 = vrcp.pop %v801
    %v810 = vrcp.pop %v804
    %v811 = vrcp.pop %v807
    %v812 = vmul.f32 %v789, %v808
    %v813 = vmul.f32 %v791, %v809
    %v814 = vmul.f32 %v793, %v810
    %v815 = vmul.f32 %v795, %v811
    %818 = vrot.lane.b32.xlu0 %v153, 112
    %v819 = vpop.permute.xlu0 %818
    %820 = vrot.lane.b32.xlu0 %v159, 112
    %v821 = vpop.permute.xlu0 %820
    %v825 = vsel %vm179, %v812, 0
    %v828 = vsel %vm179, %v813, 0
    %830 = vmatprep.subr.mxu0 0.0
    %831 = vmatpush1.msra.mxu0 %v819
    %832 = vmatprep.subr.mxu0 0.0
    %833 = vmatpush1.msra.mxu0 %v821
    %834 = vmatprep.subr.mxu0 0.0
    %835 = vmatpush1.msra.mxu0 0.0
    %836 = vmatprep.subr.mxu0 0.0
    %837 = vmatpush1.msra.mxu0 0.0
    %838 = vmatprep.subr.mxu0 0.0
    %839 = vmatpush1.msra.mxu0 0.0
    %840 = vmatprep.subr.mxu0 0.0
    %841 = vmatpush1.msra.mxu0 0.0
    %842 = vmatprep.subr.mxu0 0.0
    %843 = vmatpush1.msra.mxu0 0.0
    %844 = vmatprep.subr.mxu0 0.0
    %845 = vmatpush1.msra.mxu0 0.0
    %846 = vmatprep.subr.mxu0 0.0
    %847 = vmatpush1.msra.mxu0 0.0
    %848 = vmatprep.subr.mxu0 0.0
    %849 = vmatpush1.msra.mxu0 0.0
    %850 = vmatprep.subr.mxu0 0.0
    %851 = vmatpush1.msra.mxu0 0.0
    %852 = vmatprep.subr.mxu0 0.0
    %853 = vmatpush1.msra.mxu0 0.0
    %854 = vmatprep.subr.mxu0 0.0
    %855 = vmatpush1.msra.mxu0 0.0
    %856 = vmatprep.subr.mxu0 0.0
    %857 = vmatpush1.msra.mxu0 0.0
    %858 = vmatprep.subr.mxu0 0.0
    %859 = vmatpush1.msra.mxu0 0.0
    %860 = vmatprep.subr.mxu0 0.0
    %861 = vmatpush1.msra.mxu0 0.0
    %862 = vmatprep.subr.mxu0 0.0
    %863 = vmatpush1.msra.mxu0 0.0
    %864 = vmatprep.subr.mxu0 0.0
    %865 = vmatpush1.msra.mxu0 0.0
    %866 = vmatprep.subr.mxu0 0.0
    %867 = vmatpush1.msra.mxu0 0.0
    %868 = vmatprep.subr.mxu0 0.0
    %869 = vmatpush1.msra.mxu0 0.0
    %870 = vmatprep.subr.mxu0 0.0
    %871 = vmatpush1.msra.mxu0 0.0
    %872 = vmatprep.subr.mxu0 0.0
    %873 = vmatpush1.msra.mxu0 0.0
    %874 = vmatprep.subr.mxu0 0.0
    %875 = vmatpush1.msra.mxu0 0.0
    %876 = vmatprep.subr.mxu0 0.0
    %877 = vmatpush1.msra.mxu0 0.0
    %878 = vmatprep.subr.mxu0 0.0
    %879 = vmatpush1.msra.mxu0 0.0
    %880 = vmatprep.subr.mxu0 0.0
    %881 = vmatpush1.msra.mxu0 0.0
    %882 = vmatprep.subr.mxu0 0.0
    %883 = vmatpush1.msra.mxu0 0.0
    %884 = vmatprep.subr.mxu0 0.0
    %885 = vmatpush1.msra.mxu0 0.0
    %886 = vmatprep.subr.mxu0 0.0
    %887 = vmatpush1.msra.mxu0 0.0
    %888 = vmatprep.subr.mxu0 0.0
    %889 = vmatpush1.msra.mxu0 0.0
    %890 = vmatprep.subr.mxu0 0.0
    %891 = vmatpush1.msra.mxu0 0.0
    %892 = vmatprep.subr.mxu0 0.0
    %893 = vmatpush1.msra.mxu0 0.0
    %894 = vmatprep.mubr.f32.mxu0 0.0
    %895 = vmatmul.mubr.f32.gmra.mrb[0].mxu0 %v825
    %v896 = vpop.f32.mrb[0].mxu0
    %v897 = vadd.f32 0.0, %v896
    %v898 = vpop.f32.mrb[0].mxu0
    %899 = vmatprep.mubr.f32.mxu0 0.0
    %900 = vmatmul.mubr.f32.gmra.mrb[0].mxu0 %v828
    %v901 = vpop.f32.mrb[0].mxu0
    %v902 = vadd.f32 0.0, %v901
    %v903 = vpop.f32.mrb[0].mxu0
    %904 = vdwg.mxu0
    %907 = vrot.lane.b32.xlu0 %v165, 112
    %v908 = vpop.permute.xlu0 %907
    %909 = vrot.lane.b32.xlu0 %v171, 112
    %v910 = vpop.permute.xlu0 %909
    %v914 = vsel %vm179, %v814, 0
    %v917 = vsel %vm179, %v815, 0
    %919 = vmatprep.subr.mxu0 0.0
    %920 = vmatpush1.msra.mxu0 %v908
    %921 = vmatprep.subr.mxu0 0.0
    %922 = vmatpush1.msra.mxu0 %v910
    %923 = vmatprep.subr.mxu0 0.0
    %924 = vmatpush1.msra.mxu0 0.0
    %925 = vmatprep.subr.mxu0 0.0
    %926 = vmatpush1.msra.mxu0 0.0
    %927 = vmatprep.subr.mxu0 0.0
    %928 = vmatpush1.msra.mxu0 0.0
    %929 = vmatprep.subr.mxu0 0.0
    %930 = vmatpush1.msra.mxu0 0.0
    %931 = vmatprep.subr.mxu0 0.0
    %932 = vmatpush1.msra.mxu0 0.0
    %933 = vmatprep.subr.mxu0 0.0
    %934 = vmatpush1.msra.mxu0 0.0
    %935 = vmatprep.subr.mxu0 0.0
    %936 = vmatpush1.msra.mxu0 0.0
    %937 = vmatprep.subr.mxu0 0.0
    %938 = vmatpush1.msra.mxu0 0.0
    %939 = vmatprep.subr.mxu0 0.0
    %940 = vmatpush1.msra.mxu0 0.0
    %941 = vmatprep.subr.mxu0 0.0
    %942 = vmatpush1.msra.mxu0 0.0
    %943 = vmatprep.subr.mxu0 0.0
    %944 = vmatpush1.msra.mxu0 0.0
    %945 = vmatprep.subr.mxu0 0.0
    %946 = vmatpush1.msra.mxu0 0.0
    %947 = vmatprep.subr.mxu0 0.0
    %948 = vmatpush1.msra.mxu0 0.0
    %949 = vmatprep.subr.mxu0 0.0
    %950 = vmatpush1.msra.mxu0 0.0
    %951 = vmatprep.subr.mxu0 0.0
    %952 = vmatpush1.msra.mxu0 0.0
    %953 = vmatprep.subr.mxu0 0.0
    %954 = vmatpush1.msra.mxu0 0.0
    %955 = vmatprep.subr.mxu0 0.0
    %956 = vmatpush1.msra.mxu0 0.0
    %957 = vmatprep.subr.mxu0 0.0
    %958 = vmatpush1.msra.mxu0 0.0
    %959 = vmatprep.subr.mxu0 0.0
    %960 = vmatpush1.msra.mxu0 0.0
    %961 = vmatprep.subr.mxu0 0.0
    %962 = vmatpush1.msra.mxu0 0.0
    %963 = vmatprep.subr.mxu0 0.0
    %964 = vmatpush1.msra.mxu0 0.0
    %965 = vmatprep.subr.mxu0 0.0
    %966 = vmatpush1.msra.mxu0 0.0
    %967 = vmatprep.subr.mxu0 0.0
    %968 = vmatpush1.msra.mxu0 0.0
    %969 = vmatprep.subr.mxu0 0.0
    %970 = vmatpush1.msra.mxu0 0.0
    %971 = vmatprep.subr.mxu0 0.0
    %972 = vmatpush1.msra.mxu0 0.0
    %973 = vmatprep.subr.mxu0 0.0
    %974 = vmatpush1.msra.mxu0 0.0
    %975 = vmatprep.subr.mxu0 0.0
    %976 = vmatpush1.msra.mxu0 0.0
    %977 = vmatprep.subr.mxu0 0.0
    %978 = vmatpush1.msra.mxu0 0.0
    %979 = vmatprep.subr.mxu0 0.0
    %980 = vmatpush1.msra.mxu0 0.0
    %981 = vmatprep.subr.mxu0 0.0
    %982 = vmatpush1.msra.mxu0 0.0
    %983 = vmatprep.mubr.f32.mxu0 0.0
    %984 = vmatmul.mubr.f32.gmra.mrb[0].mxu0 %v914
    %v985 = vpop.f32.mrb[0].mxu0
    %v986 = vadd.f32 0.0, %v985
    %v987 = vpop.f32.mrb[0].mxu0
    %988 = vmatprep.mubr.f32.mxu0 0.0
    %989 = vmatmul.mubr.f32.gmra.mrb[0].mxu0 %v917
    %v990 = vpop.f32.mrb[0].mxu0
    %v991 = vadd.f32 0.0, %v990
    %v992 = vpop.f32.mrb[0].mxu0
    %993 = vdwg.mxu0
    %998 = vrot.lane.b32.xlu0 %v897, 16
    %v999 = vpop.permute.xlu0 %998
    %1000 = vrot.lane.b32.xlu0 %v902, 16
    %v1001 = vpop.permute.xlu0 %1000
    %1002 = vrot.lane.b32.xlu0 %v986, 16
    %v1003 = vpop.permute.xlu0 %1002
    %1004 = vrot.lane.b32.xlu0 %v991, 16
    %v1005 = vpop.permute.xlu0 %1004
    %vm1010 = vcmask 261248
    %1011 = vst.msk [vmem:[#allocation2] sm:$0xff] %vm1010, %v999
    %1012 = vst.msk [vmem:[#allocation2 + $0x8] sm:$0xff] %vm1010, %v1001
    %1013 = vst.msk [vmem:[#allocation2 + $0x10] sm:$0xff] %vm1010, %v1003
    %1014 = vst.msk [vmem:[#allocation2 + $0x18] sm:$0xff] %vm1010, %v1005
    %1015 = vrot.lane.b32.xlu0 %v151, 96
    %v1016 = vpop.permute.xlu0 %1015
    %1017 = vrot.lane.b32.xlu0 %v157, 96
    %v1018 = vpop.permute.xlu0 %1017
    %1019 = vrot.lane.b32.xlu0 %v151, 32
    %v1020 = vpop.permute.xlu0 %1019
    %1021 = vrot.lane.b32.xlu0 %v157, 32
    %v1022 = vpop.permute.xlu0 %1021
    %v1023 = vsel %vm179, %v1016, 0
    %v1025 = vsel %vm179, %v1018, 0
    %v1027 = vsel %vm179, %v1020, 0
    %v1029 = vsel %vm179, %v1022, 0
    %1031 = vmatprep.subr.mxu0 0.0
    %1032 = vmatpush1.xpose.msra.mxu0 %v1027
    %1033 = vmatprep.subr.mxu0 0.0
    %1034 = vmatpush1.xpose.msra.mxu0 %v1029
    %1035 = vmatprep.subr.mxu0 0.0
    %1036 = vmatpush1.xpose.msra.mxu0 0.0
    %1037 = vmatprep.subr.mxu0 0.0
    %1038 = vmatpush1.xpose.msra.mxu0 0.0
    %1039 = vmatprep.subr.mxu0 0.0
    %1040 = vmatpush1.xpose.msra.mxu0 0.0
    %1041 = vmatprep.subr.mxu0 0.0
    %1042 = vmatpush1.xpose.msra.mxu0 0.0
    %1043 = vmatprep.subr.mxu0 0.0
    %1044 = vmatpush1.xpose.msra.mxu0 0.0
    %1045 = vmatprep.subr.mxu0 0.0
    %1046 = vmatpush1.xpose.msra.mxu0 0.0
    %1047 = vmatprep.subr.mxu0 0.0
    %1048 = vmatpush1.xpose.msra.mxu0 0.0
    %1049 = vmatprep.subr.mxu0 0.0
    %1050 = vmatpush1.xpose.msra.mxu0 0.0
    %1051 = vmatprep.subr.mxu0 0.0
    %1052 = vmatpush1.xpose.msra.mxu0 0.0
    %1053 = vmatprep.subr.mxu0 0.0
    %1054 = vmatpush1.xpose.msra.mxu0 0.0
    %1055 = vmatprep.subr.mxu0 0.0
    %1056 = vmatpush1.xpose.msra.mxu0 0.0
    %1057 = vmatprep.subr.mxu0 0.0
    %1058 = vmatpush1.xpose.msra.mxu0 0.0
    %1059 = vmatprep.subr.mxu0 0.0
    %1060 = vmatpush1.xpose.msra.mxu0 0.0
    %1061 = vmatprep.subr.mxu0 0.0
    %1062 = vmatpush1.xpose.msra.mxu0 0.0
    %1063 = vmatprep.subr.mxu0 0.0
    %1064 = vmatpush1.xpose.msra.mxu0 0.0
    %1065 = vmatprep.subr.mxu0 0.0
    %1066 = vmatpush1.xpose.msra.mxu0 0.0
    %1067 = vmatprep.subr.mxu0 0.0
    %1068 = vmatpush1.xpose.msra.mxu0 0.0
    %1069 = vmatprep.subr.mxu0 0.0
    %1070 = vmatpush1.xpose.msra.mxu0 0.0
    %1071 = vmatprep.subr.mxu0 0.0
    %1072 = vmatpush1.xpose.msra.mxu0 0.0
    %1073 = vmatprep.subr.mxu0 0.0
    %1074 = vmatpush1.xpose.msra.mxu0 0.0
    %1075 = vmatprep.subr.mxu0 0.0
    %1076 = vmatpush1.xpose.msra.mxu0 0.0
    %1077 = vmatprep.subr.mxu0 0.0
    %1078 = vmatpush1.xpose.msra.mxu0 0.0
    %1079 = vmatprep.subr.mxu0 0.0
    %1080 = vmatpush1.xpose.msra.mxu0 0.0
    %1081 = vmatprep.subr.mxu0 0.0
    %1082 = vmatpush1.xpose.msra.mxu0 0.0
    %1083 = vmatprep.subr.mxu0 0.0
    %1084 = vmatpush1.xpose.msra.mxu0 0.0
    %1085 = vmatprep.subr.mxu0 0.0
    %1086 = vmatpush1.xpose.msra.mxu0 0.0
    %1087 = vmatprep.subr.mxu0 0.0
    %1088 = vmatpush1.xpose.msra.mxu0 0.0
    %1089 = vmatprep.subr.mxu0 0.0
    %1090 = vmatpush1.xpose.msra.mxu0 0.0
    %1091 = vmatprep.subr.mxu0 0.0
    %1092 = vmatpush1.xpose.msra.mxu0 0.0
    %1093 = vmatprep.subr.mxu0 0.0
    %1094 = vmatpush1.xpose.msra.mxu0 0.0
    %1095 = vmatprep.mubr.f32.mxu0 0.0
    %1096 = vmatmul.mubr.f32.gmra.mrb[0].mxu0 %v1023
    %v1097 = vpop.f32.mrb[0].mxu0
    %v1098 = vadd.f32 0.0, %v1097
    %v1099 = vpop.f32.mrb[0].mxu0
    %1100 = vmatprep.mubr.f32.mxu0 0.0
    %1101 = vmatmul.mubr.f32.gmra.mrb[0].mxu0 %v1025
    %v1102 = vpop.f32.mrb[0].mxu0
    %v1103 = vadd.f32 0.0, %v1102
    %v1104 = vpop.f32.mrb[0].mxu0
    %1105 = vdwg.mxu0
    %1106 = vrot.lane.b32.xlu0 %v163, 96
    %v1107 = vpop.permute.xlu0 %1106
    %1108 = vrot.lane.b32.xlu0 %v169, 96
    %v1109 = vpop.permute.xlu0 %1108
    %1110 = vrot.lane.b32.xlu0 %v163, 32
    %v1111 = vpop.permute.xlu0 %1110
    %1112 = vrot.lane.b32.xlu0 %v169, 32
    %v1113 = vpop.permute.xlu0 %1112
    %v1114 = vsel %vm179, %v1107, 0
    %v1116 = vsel %vm179, %v1109, 0
    %v1118 = vsel %vm179, %v1111, 0
    %v1120 = vsel %vm179, %v1113, 0
    %1122 = vmatprep.subr.mxu0 0.0
    %1123 = vmatpush1.xpose.msra.mxu0 %v1118
    %1124 = vmatprep.subr.mxu0 0.0
    %1125 = vmatpush1.xpose.msra.mxu0 %v1120
    %1126 = vmatprep.subr.mxu0 0.0
    %1127 = vmatpush1.xpose.msra.mxu0 0.0
    %1128 = vmatprep.subr.mxu0 0.0
    %1129 = vmatpush1.xpose.msra.mxu0 0.0
    %1130 = vmatprep.subr.mxu0 0.0
    %1131 = vmatpush1.xpose.msra.mxu0 0.0
    %1132 = vmatprep.subr.mxu0 0.0
    %1133 = vmatpush1.xpose.msra.mxu0 0.0
    %1134 = vmatprep.subr.mxu0 0.0
    %1135 = vmatpush1.xpose.msra.mxu0 0.0
    %1136 = vmatprep.subr.mxu0 0.0
    %1137 = vmatpush1.xpose.msra.mxu0 0.0
    %1138 = vmatprep.subr.mxu0 0.0
    %1139 = vmatpush1.xpose.msra.mxu0 0.0
    %1140 = vmatprep.subr.mxu0 0.0
    %1141 = vmatpush1.xpose.msra.mxu0 0.0
    %1142 = vmatprep.subr.mxu0 0.0
    %1143 = vmatpush1.xpose.msra.mxu0 0.0
    %1144 = vmatprep.subr.mxu0 0.0
    %1145 = vmatpush1.xpose.msra.mxu0 0.0
    %1146 = vmatprep.subr.mxu0 0.0
    %1147 = vmatpush1.xpose.msra.mxu0 0.0
    %1148 = vmatprep.subr.mxu0 0.0
    %1149 = vmatpush1.xpose.msra.mxu0 0.0
    %1150 = vmatprep.subr.mxu0 0.0
    %1151 = vmatpush1.xpose.msra.mxu0 0.0
    %1152 = vmatprep.subr.mxu0 0.0
    %1153 = vmatpush1.xpose.msra.mxu0 0.0
    %1154 = vmatprep.subr.mxu0 0.0
    %1155 = vmatpush1.xpose.msra.mxu0 0.0
    %1156 = vmatprep.subr.mxu0 0.0
    %1157 = vmatpush1.xpose.msra.mxu0 0.0
    %1158 = vmatprep.subr.mxu0 0.0
    %1159 = vmatpush1.xpose.msra.mxu0 0.0
    %1160 = vmatprep.subr.mxu0 0.0
    %1161 = vmatpush1.xpose.msra.mxu0 0.0
    %1162 = vmatprep.subr.mxu0 0.0
    %1163 = vmatpush1.xpose.msra.mxu0 0.0
    %1164 = vmatprep.subr.mxu0 0.0
    %1165 = vmatpush1.xpose.msra.mxu0 0.0
    %1166 = vmatprep.subr.mxu0 0.0
    %1167 = vmatpush1.xpose.msra.mxu0 0.0
    %1168 = vmatprep.subr.mxu0 0.0
    %1169 = vmatpush1.xpose.msra.mxu0 0.0
    %1170 = vmatprep.subr.mxu0 0.0
    %1171 = vmatpush1.xpose.msra.mxu0 0.0
    %1172 = vmatprep.subr.mxu0 0.0
    %1173 = vmatpush1.xpose.msra.mxu0 0.0
    %1174 = vmatprep.subr.mxu0 0.0
    %1175 = vmatpush1.xpose.msra.mxu0 0.0
    %1176 = vmatprep.subr.mxu0 0.0
    %1177 = vmatpush1.xpose.msra.mxu0 0.0
    %1178 = vmatprep.subr.mxu0 0.0
    %1179 = vmatpush1.xpose.msra.mxu0 0.0
    %1180 = vmatprep.subr.mxu0 0.0
    %1181 = vmatpush1.xpose.msra.mxu0 0.0
    %1182 = vmatprep.subr.mxu0 0.0
    %1183 = vmatpush1.xpose.msra.mxu0 0.0
    %1184 = vmatprep.subr.mxu0 0.0
    %1185 = vmatpush1.xpose.msra.mxu0 0.0
    %1186 = vmatprep.mubr.f32.mxu0 0.0
    %1187 = vmatmul.mubr.f32.gmra.mrb[0].mxu0 %v1114
    %v1188 = vpop.f32.mrb[0].mxu0
    %v1189 = vadd.f32 0.0, %v1188
    %v1190 = vpop.f32.mrb[0].mxu0
    %1191 = vmatprep.mubr.f32.mxu0 0.0
    %1192 = vmatmul.mubr.f32.gmra.mrb[0].mxu0 %v1116
    %v1193 = vpop.f32.mrb[0].mxu0
    %v1194 = vadd.f32 0.0, %v1193
    %v1195 = vpop.f32.mrb[0].mxu0
    %1196 = vdwg.mxu0
    %v1197 = vmul.f32 %v1098, 0.25
    %v1198 = vmul.f32 %v1103, 0.25
    %v1199 = vmul.f32 %v1189, 0.25
    %v1200 = vmul.f32 %v1194, 0.25
    %v1201 = vadd.f32 %v1197, %v361
    %v1202 = vadd.f32 %v1198, %v361
    %v1203 = vadd.f32 %v1199, %v365
    %v1204 = vadd.f32 %v1200, %v365
    %v1205 = vsel %vm179, %v1201, -inf
    %1206 = vmax.xlane.f32.xlu0 %v1205
    %v1207 = vpop.xlane.xlu0 %1206
    %v1208 = vsel %vm179, %v1202, -inf
    %1209 = vmax.xlane.f32.xlu0 %v1208
    %v1210 = vpop.xlane.xlu0 %1209
    %v1211 = vsel %vm179, %v1203, -inf
    %1212 = vmax.xlane.f32.xlu0 %v1211
    %v1213 = vpop.xlane.xlu0 %1212
    %v1214 = vsel %vm179, %v1204, -inf
    %1215 = vmax.xlane.f32.xlu0 %v1214
    %v1216 = vpop.xlane.xlu0 %1215
    %v1217 = vsub.f32 %v1201, %v1207
    %v1218 = vsub.f32 %v1202, %v1210
    %v1219 = vsub.f32 %v1203, %v1213
    %v1220 = vsub.f32 %v1204, %v1216
    %v1221 = vmul.f32 %v1217, 1.442695
    %v1222 = vpow.pop %v1221
    %v1223 = vmul.f32 %v1218, 1.442695
    %v1224 = vpow.pop %v1223
    %v1225 = vmul.f32 %v1219, 1.442695
    %v1226 = vpow.pop %v1225
    %v1227 = vmul.f32 %v1220, 1.442695
    %v1228 = vpow.pop %v1227
    %v1229 = vsel %vm179, %v1222, 0.0
    %1230 = vadd.xlane.f32.xlu0 %v1229
    %v1231 = vpop.xlane.xlu0 %1230
    %v1232 = vsel %vm179, %v1224, 0.0
    %1233 = vadd.xlane.f32.xlu0 %v1232
    %v1234 = vpop.xlane.xlu0 %1233
    %v1235 = vsel %vm179, %v1226, 0.0
    %1236 = vadd.xlane.f32.xlu0 %v1235
    %v1237 = vpop.xlane.xlu0 %1236
    %v1238 = vsel %vm179, %v1228, 0.0
    %1239 = vadd.xlane.f32.xlu0 %v1238
    %v1240 = vpop.xlane.xlu0 %1239
    %v1241 = vrcp.pop %v1231
    %v1242 = vrcp.pop %v1234
    %v1243 = vrcp.pop %v1237
    %v1244 = vrcp.pop %v1240
    %v1245 = vmul.f32 %v1222, %v1241
    %v1246 = vmul.f32 %v1224, %v1242
    %v1247 = vmul.f32 %v1226, %v1243
    %v1248 = vmul.f32 %v1228, %v1244
    %1249 = vrot.lane.b32.xlu0 %v153, 96
    %v1250 = vpop.permute.xlu0 %1249
    %1251 = vrot.lane.b32.xlu0 %v159, 96
    %v1252 = vpop.permute.xlu0 %1251
    %v1256 = vsel %vm179, %v1245, 0
    %v1259 = vsel %vm179, %v1246, 0
    %1261 = vmatprep.subr.mxu0 0.0
    %1262 = vmatpush1.msra.mxu0 %v1250
    %1263 = vmatprep.subr.mxu0 0.0
    %1264 = vmatpush1.msra.mxu0 %v1252
    %1265 = vmatprep.subr.mxu0 0.0
    %1266 = vmatpush1.msra.mxu0 0.0
    %1267 = vmatprep.subr.mxu0 0.0
    %1268 = vmatpush1.msra.mxu0 0.0
    %1269 = vmatprep.subr.mxu0 0.0
    %1270 = vmatpush1.msra.mxu0 0.0
    %1271 = vmatprep.subr.mxu0 0.0
    %1272 = vmatpush1.msra.mxu0 0.0
    %1273 = vmatprep.subr.mxu0 0.0
    %1274 = vmatpush1.msra.mxu0 0.0
    %1275 = vmatprep.subr.mxu0 0.0
    %1276 = vmatpush1.msra.mxu0 0.0
    %1277 = vmatprep.subr.mxu0 0.0
    %1278 = vmatpush1.msra.mxu0 0.0
    %1279 = vmatprep.subr.mxu0 0.0
    %1280 = vmatpush1.msra.mxu0 0.0
    %1281 = vmatprep.subr.mxu0 0.0
    %1282 = vmatpush1.msra.mxu0 0.0
    %1283 = vmatprep.subr.mxu0 0.0
    %1284 = vmatpush1.msra.mxu0 0.0
    %1285 = vmatprep.subr.mxu0 0.0
    %1286 = vmatpush1.msra.mxu0 0.0
    %1287 = vmatprep.subr.mxu0 0.0
    %1288 = vmatpush1.msra.mxu0 0.0
    %1289 = vmatprep.subr.mxu0 0.0
    %1290 = vmatpush1.msra.mxu0 0.0
    %1291 = vmatprep.subr.mxu0 0.0
    %1292 = vmatpush1.msra.mxu0 0.0
    %1293 = vmatprep.subr.mxu0 0.0
    %1294 = vmatpush1.msra.mxu0 0.0
    %1295 = vmatprep.subr.mxu0 0.0
    %1296 = vmatpush1.msra.mxu0 0.0
    %1297 = vmatprep.subr.mxu0 0.0
    %1298 = vmatpush1.msra.mxu0 0.0
    %1299 = vmatprep.subr.mxu0 0.0
    %1300 = vmatpush1.msra.mxu0 0.0
    %1301 = vmatprep.subr.mxu0 0.0
    %1302 = vmatpush1.msra.mxu0 0.0
    %1303 = vmatprep.subr.mxu0 0.0
    %1304 = vmatpush1.msra.mxu0 0.0
    %1305 = vmatprep.subr.mxu0 0.0
    %1306 = vmatpush1.msra.mxu0 0.0
    %1307 = vmatprep.subr.mxu0 0.0
    %1308 = vmatpush1.msra.mxu0 0.0
    %1309 = vmatprep.subr.mxu0 0.0
    %1310 = vmatpush1.msra.mxu0 0.0
    %1311 = vmatprep.subr.mxu0 0.0
    %1312 = vmatpush1.msra.mxu0 0.0
    %1313 = vmatprep.subr.mxu0 0.0
    %1314 = vmatpush1.msra.mxu0 0.0
    %1315 = vmatprep.subr.mxu0 0.0
    %1316 = vmatpush1.msra.mxu0 0.0
    %1317 = vmatprep.subr.mxu0 0.0
    %1318 = vmatpush1.msra.mxu0 0.0
    %1319 = vmatprep.subr.mxu0 0.0
    %1320 = vmatpush1.msra.mxu0 0.0
    %1321 = vmatprep.subr.mxu0 0.0
    %1322 = vmatpush1.msra.mxu0 0.0
    %1323 = vmatprep.subr.mxu0 0.0
    %1324 = vmatpush1.msra.mxu0 0.0
    %1325 = vmatprep.mubr.f32.mxu0 0.0
    %1326 = vmatmul.mubr.f32.gmra.mrb[0].mxu0 %v1256
    %v1327 = vpop.f32.mrb[0].mxu0
    %v1328 = vadd.f32 0.0, %v1327
    %v1329 = vpop.f32.mrb[0].mxu0
    %1330 = vmatprep.mubr.f32.mxu0 0.0
    %1331 = vmatmul.mubr.f32.gmra.mrb[0].mxu0 %v1259
    %v1332 = vpop.f32.mrb[0].mxu0
    %v1333 = vadd.f32 0.0, %v1332
    %v1334 = vpop.f32.mrb[0].mxu0
    %1335 = vdwg.mxu0
    %1336 = vrot.lane.b32.xlu0 %v165, 96
    %v1337 = vpop.permute.xlu0 %1336
    %1338 = vrot.lane.b32.xlu0 %v171, 96
    %v1339 = vpop.permute.xlu0 %1338
    %v1343 = vsel %vm179, %v1247, 0
    %v1346 = vsel %vm179, %v1248, 0
    %1348 = vmatprep.subr.mxu0 0.0
    %1349 = vmatpush1.msra.mxu0 %v1337
    %1350 = vmatprep.subr.mxu0 0.0
    %1351 = vmatpush1.msra.mxu0 %v1339
    %1352 = vmatprep.subr.mxu0 0.0
    %1353 = vmatpush1.msra.mxu0 0.0
    %1354 = vmatprep.subr.mxu0 0.0
    %1355 = vmatpush1.msra.mxu0 0.0
    %1356 = vmatprep.subr.mxu0 0.0
    %1357 = vmatpush1.msra.mxu0 0.0
    %1358 = vmatprep.subr.mxu0 0.0
    %1359 = vmatpush1.msra.mxu0 0.0
    %1360 = vmatprep.subr.mxu0 0.0
    %1361 = vmatpush1.msra.mxu0 0.0
    %1362 = vmatprep.subr.mxu0 0.0
    %1363 = vmatpush1.msra.mxu0 0.0
    %1364 = vmatprep.subr.mxu0 0.0
    %1365 = vmatpush1.msra.mxu0 0.0
    %1366 = vmatprep.subr.mxu0 0.0
    %1367 = vmatpush1.msra.mxu0 0.0
    %1368 = vmatprep.subr.mxu0 0.0
    %1369 = vmatpush1.msra.mxu0 0.0
    %1370 = vmatprep.subr.mxu0 0.0
    %1371 = vmatpush1.msra.mxu0 0.0
    %1372 = vmatprep.subr.mxu0 0.0
    %1373 = vmatpush1.msra.mxu0 0.0
    %1374 = vmatprep.subr.mxu0 0.0
    %1375 = vmatpush1.msra.mxu0 0.0
    %1376 = vmatprep.subr.mxu0 0.0
    %1377 = vmatpush1.msra.mxu0 0.0
    %1378 = vmatprep.subr.mxu0 0.0
    %1379 = vmatpush1.msra.mxu0 0.0
    %1380 = vmatprep.subr.mxu0 0.0
    %1381 = vmatpush1.msra.mxu0 0.0
    %1382 = vmatprep.subr.mxu0 0.0
    %1383 = vmatpush1.msra.mxu0 0.0
    %1384 = vmatprep.subr.mxu0 0.0
    %1385 = vmatpush1.msra.mxu0 0.0
    %1386 = vmatprep.subr.mxu0 0.0
    %1387 = vmatpush1.msra.mxu0 0.0
    %1388 = vmatprep.subr.mxu0 0.0
    %1389 = vmatpush1.msra.mxu0 0.0
    %1390 = vmatprep.subr.mxu0 0.0
    %1391 = vmatpush1.msra.mxu0 0.0
    %1392 = vmatprep.subr.mxu0 0.0
    %1393 = vmatpush1.msra.mxu0 0.0
    %1394 = vmatprep.subr.mxu0 0.0
    %1395 = vmatpush1.msra.mxu0 0.0
    %1396 = vmatprep.subr.mxu0 0.0
    %1397 = vmatpush1.msra.mxu0 0.0
    %1398 = vmatprep.subr.mxu0 0.0
    %1399 = vmatpush1.msra.mxu0 0.0
    %1400 = vmatprep.subr.mxu0 0.0
    %1401 = vmatpush1.msra.mxu0 0.0
    %1402 = vmatprep.subr.mxu0 0.0
    %1403 = vmatpush1.msra.mxu0 0.0
    %1404 = vmatprep.subr.mxu0 0.0
    %1405 = vmatpush1.msra.mxu0 0.0
    %1406 = vmatprep.subr.mxu0 0.0
    %1407 = vmatpush1.msra.mxu0 0.0
    %1408 = vmatprep.subr.mxu0 0.0
    %1409 = vmatpush1.msra.mxu0 0.0
    %1410 = vmatprep.subr.mxu0 0.0
    %1411 = vmatpush1.msra.mxu0 0.0
    %1412 = vmatprep.mubr.f32.mxu0 0.0
    %1413 = vmatmul.mubr.f32.gmra.mrb[0].mxu0 %v1343
    %v1414 = vpop.f32.mrb[0].mxu0
    %v1415 = vadd.f32 0.0, %v1414
    %v1416 = vpop.f32.mrb[0].mxu0
    %1417 = vmatprep.mubr.f32.mxu0 0.0
    %1418 = vmatmul.mubr.f32.gmra.mrb[0].mxu0 %v1346
    %v1419 = vpop.f32.mrb[0].mxu0
    %v1420 = vadd.f32 0.0, %v1419
    %v1421 = vpop.f32.mrb[0].mxu0
    %1422 = vdwg.mxu0
    %1427 = vrot.lane.b32.xlu0 %v1328, 32
    %v1428 = vpop.permute.xlu0 %1427
    %1429 = vrot.lane.b32.xlu0 %v1333, 32
    %v1430 = vpop.permute.xlu0 %1429
    %1431 = vrot.lane.b32.xlu0 %v1415, 32
    %v1432 = vpop.permute.xlu0 %1431
    %1433 = vrot.lane.b32.xlu0 %v1420, 32
    %v1434 = vpop.permute.xlu0 %1433
    %vm1439 = vcmask 392448
    %1440 = vst.msk [vmem:[#allocation2] sm:$0xff] %vm1439, %v1428
    %1441 = vst.msk [vmem:[#allocation2 + $0x8] sm:$0xff] %vm1439, %v1430
    %1442 = vst.msk [vmem:[#allocation2 + $0x10] sm:$0xff] %vm1439, %v1432
    %1443 = vst.msk [vmem:[#allocation2 + $0x18] sm:$0xff] %vm1439, %v1434
    %1444 = vrot.lane.b32.xlu0 %v151, 80
    %v1445 = vpop.permute.xlu0 %1444
    %1446 = vrot.lane.b32.xlu0 %v157, 80
    %v1447 = vpop.permute.xlu0 %1446
    %1448 = vrot.lane.b32.xlu0 %v151, 16
    %v1449 = vpop.permute.xlu0 %1448
    %1450 = vrot.lane.b32.xlu0 %v157, 16
    %v1451 = vpop.permute.xlu0 %1450
    %v1452 = vsel %vm179, %v1445, 0
    %v1454 = vsel %vm179, %v1447, 0
    %v1456 = vsel %vm179, %v1449, 0
    %v1458 = vsel %vm179, %v1451, 0
    %1460 = vmatprep.subr.mxu0 0.0
    %1461 = vmatpush1.xpose.msra.mxu0 %v1456
    %1462 = vmatprep.subr.mxu0 0.0
    %1463 = vmatpush1.xpose.msra.mxu0 %v1458
    %1464 = vmatprep.subr.mxu0 0.0
    %1465 = vmatpush1.xpose.msra.mxu0 0.0
    %1466 = vmatprep.subr.mxu0 0.0
    %1467 = vmatpush1.xpose.msra.mxu0 0.0
    %1468 = vmatprep.subr.mxu0 0.0
    %1469 = vmatpush1.xpose.msra.mxu0 0.0
    %1470 = vmatprep.subr.mxu0 0.0
    %1471 = vmatpush1.xpose.msra.mxu0 0.0
    %1472 = vmatprep.subr.mxu0 0.0
    %1473 = vmatpush1.xpose.msra.mxu0 0.0
    %1474 = vmatprep.subr.mxu0 0.0
    %1475 = vmatpush1.xpose.msra.mxu0 0.0
    %1476 = vmatprep.subr.mxu0 0.0
    %1477 = vmatpush1.xpose.msra.mxu0 0.0
    %1478 = vmatprep.subr.mxu0 0.0
    %1479 = vmatpush1.xpose.msra.mxu0 0.0
    %1480 = vmatprep.subr.mxu0 0.0
    %1481 = vmatpush1.xpose.msra.mxu0 0.0
    %1482 = vmatprep.subr.mxu0 0.0
    %1483 = vmatpush1.xpose.msra.mxu0 0.0
    %1484 = vmatprep.subr.mxu0 0.0
    %1485 = vmatpush1.xpose.msra.mxu0 0.0
    %1486 = vmatprep.subr.mxu0 0.0
    %1487 = vmatpush1.xpose.msra.mxu0 0.0
    %1488 = vmatprep.subr.mxu0 0.0
    %1489 = vmatpush1.xpose.msra.mxu0 0.0
    %1490 = vmatprep.subr.mxu0 0.0
    %1491 = vmatpush1.xpose.msra.mxu0 0.0
    %1492 = vmatprep.subr.mxu0 0.0
    %1493 = vmatpush1.xpose.msra.mxu0 0.0
    %1494 = vmatprep.subr.mxu0 0.0
    %1495 = vmatpush1.xpose.msra.mxu0 0.0
    %1496 = vmatprep.subr.mxu0 0.0
    %1497 = vmatpush1.xpose.msra.mxu0 0.0
    %1498 = vmatprep.subr.mxu0 0.0
    %1499 = vmatpush1.xpose.msra.mxu0 0.0
    %1500 = vmatprep.subr.mxu0 0.0
    %1501 = vmatpush1.xpose.msra.mxu0 0.0
    %1502 = vmatprep.subr.mxu0 0.0
    %1503 = vmatpush1.xpose.msra.mxu0 0.0
    %1504 = vmatprep.subr.mxu0 0.0
    %1505 = vmatpush1.xpose.msra.mxu0 0.0
    %1506 = vmatprep.subr.mxu0 0.0
    %1507 = vmatpush1.xpose.msra.mxu0 0.0
    %1508 = vmatprep.subr.mxu0 0.0
    %1509 = vmatpush1.xpose.msra.mxu0 0.0
    %1510 = vmatprep.subr.mxu0 0.0
    %1511 = vmatpush1.xpose.msra.mxu0 0.0
    %1512 = vmatprep.subr.mxu0 0.0
    %1513 = vmatpush1.xpose.msra.mxu0 0.0
    %1514 = vmatprep.subr.mxu0 0.0
    %1515 = vmatpush1.xpose.msra.mxu0 0.0
    %1516 = vmatprep.subr.mxu0 0.0
    %1517 = vmatpush1.xpose.msra.mxu0 0.0
    %1518 = vmatprep.subr.mxu0 0.0
    %1519 = vmatpush1.xpose.msra.mxu0 0.0
    %1520 = vmatprep.subr.mxu0 0.0
    %1521 = vmatpush1.xpose.msra.mxu0 0.0
    %1522 = vmatprep.subr.mxu0 0.0
    %1523 = vmatpush1.xpose.msra.mxu0 0.0
    %1524 = vmatprep.mubr.f32.mxu0 0.0
    %1525 = vmatmul.mubr.f32.gmra.mrb[0].mxu0 %v1452
    %v1526 = vpop.f32.mrb[0].mxu0
    %v1527 = vadd.f32 0.0, %v1526
    %v1528 = vpop.f32.mrb[0].mxu0
    %1529 = vmatprep.mubr.f32.mxu0 0.0
    %1530 = vmatmul.mubr.f32.gmra.mrb[0].mxu0 %v1454
    %v1531 = vpop.f32.mrb[0].mxu0
    %v1532 = vadd.f32 0.0, %v1531
    %v1533 = vpop.f32.mrb[0].mxu0
    %1534 = vdwg.mxu0
    %1535 = vrot.lane.b32.xlu0 %v163, 80
    %v1536 = vpop.permute.xlu0 %1535
    %1537 = vrot.lane.b32.xlu0 %v169, 80
    %v1538 = vpop.permute.xlu0 %1537
    %1539 = vrot.lane.b32.xlu0 %v163, 16
    %v1540 = vpop.permute.xlu0 %1539
    %1541 = vrot.lane.b32.xlu0 %v169, 16
    %v1542 = vpop.permute.xlu0 %1541
    %v1543 = vsel %vm179, %v1536, 0
    %v1545 = vsel %vm179, %v1538, 0
    %v1547 = vsel %vm179, %v1540, 0
    %v1549 = vsel %vm179, %v1542, 0
    %1551 = vmatprep.subr.mxu0 0.0
    %1552 = vmatpush1.xpose.msra.mxu0 %v1547
    %1553 = vmatprep.subr.mxu0 0.0
    %1554 = vmatpush1.xpose.msra.mxu0 %v1549
    %1555 = vmatprep.subr.mxu0 0.0
    %1556 = vmatpush1.xpose.msra.mxu0 0.0
    %1557 = vmatprep.subr.mxu0 0.0
    %1558 = vmatpush1.xpose.msra.mxu0 0.0
    %1559 = vmatprep.subr.mxu0 0.0
    %1560 = vmatpush1.xpose.msra.mxu0 0.0
    %1561 = vmatprep.subr.mxu0 0.0
    %1562 = vmatpush1.xpose.msra.mxu0 0.0
    %1563 = vmatprep.subr.mxu0 0.0
    %1564 = vmatpush1.xpose.msra.mxu0 0.0
    %1565 = vmatprep.subr.mxu0 0.0
    %1566 = vmatpush1.xpose.msra.mxu0 0.0
    %1567 = vmatprep.subr.mxu0 0.0
    %1568 = vmatpush1.xpose.msra.mxu0 0.0
    %1569 = vmatprep.subr.mxu0 0.0
    %1570 = vmatpush1.xpose.msra.mxu0 0.0
    %1571 = vmatprep.subr.mxu0 0.0
    %1572 = vmatpush1.xpose.msra.mxu0 0.0
    %1573 = vmatprep.subr.mxu0 0.0
    %1574 = vmatpush1.xpose.msra.mxu0 0.0
    %1575 = vmatprep.subr.mxu0 0.0
    %1576 = vmatpush1.xpose.msra.mxu0 0.0
    %1577 = vmatprep.subr.mxu0 0.0
    %1578 = vmatpush1.xpose.msra.mxu0 0.0
    %1579 = vmatprep.subr.mxu0 0.0
    %1580 = vmatpush1.xpose.msra.mxu0 0.0
    %1581 = vmatprep.subr.mxu0 0.0
    %1582 = vmatpush1.xpose.msra.mxu0 0.0
    %1583 = vmatprep.subr.mxu0 0.0
    %1584 = vmatpush1.xpose.msra.mxu0 0.0
    %1585 = vmatprep.subr.mxu0 0.0
    %1586 = vmatpush1.xpose.msra.mxu0 0.0
    %1587 = vmatprep.subr.mxu0 0.0
    %1588 = vmatpush1.xpose.msra.mxu0 0.0
    %1589 = vmatprep.subr.mxu0 0.0
    %1590 = vmatpush1.xpose.msra.mxu0 0.0
    %1591 = vmatprep.subr.mxu0 0.0
    %1592 = vmatpush1.xpose.msra.mxu0 0.0
    %1593 = vmatprep.subr.mxu0 0.0
    %1594 = vmatpush1.xpose.msra.mxu0 0.0
    %1595 = vmatprep.subr.mxu0 0.0
    %1596 = vmatpush1.xpose.msra.mxu0 0.0
    %1597 = vmatprep.subr.mxu0 0.0
    %1598 = vmatpush1.xpose.msra.mxu0 0.0
    %1599 = vmatprep.subr.mxu0 0.0
    %1600 = vmatpush1.xpose.msra.mxu0 0.0
    %1601 = vmatprep.subr.mxu0 0.0
    %1602 = vmatpush1.xpose.msra.mxu0 0.0
    %1603 = vmatprep.subr.mxu0 0.0
    %1604 = vmatpush1.xpose.msra.mxu0 0.0
    %1605 = vmatprep.subr.mxu0 0.0
    %1606 = vmatpush1.xpose.msra.mxu0 0.0
    %1607 = vmatprep.subr.mxu0 0.0
    %1608 = vmatpush1.xpose.msra.mxu0 0.0
    %1609 = vmatprep.subr.mxu0 0.0
    %1610 = vmatpush1.xpose.msra.mxu0 0.0
    %1611 = vmatprep.subr.mxu0 0.0
    %1612 = vmatpush1.xpose.msra.mxu0 0.0
    %1613 = vmatprep.subr.mxu0 0.0
    %1614 = vmatpush1.xpose.msra.mxu0 0.0
    %1615 = vmatprep.mubr.f32.mxu0 0.0
    %1616 = vmatmul.mubr.f32.gmra.mrb[0].mxu0 %v1543
    %v1617 = vpop.f32.mrb[0].mxu0
    %v1618 = vadd.f32 0.0, %v1617
    %v1619 = vpop.f32.mrb[0].mxu0
    %1620 = vmatprep.mubr.f32.mxu0 0.0
    %1621 = vmatmul.mubr.f32.gmra.mrb[0].mxu0 %v1545
    %v1622 = vpop.f32.mrb[0].mxu0
    %v1623 = vadd.f32 0.0, %v1622
    %v1624 = vpop.f32.mrb[0].mxu0
    %1625 = vdwg.mxu0
    %v1626 = vmul.f32 %v1527, 0.25
    %v1627 = vmul.f32 %v1532, 0.25
    %v1628 = vmul.f32 %v1618, 0.25
    %v1629 = vmul.f32 %v1623, 0.25
    %v1630 = vadd.f32 %v1626, %v361
    %v1631 = vadd.f32 %v1627, %v361
    %v1632 = vadd.f32 %v1628, %v365
    %v1633 = vadd.f32 %v1629, %v365
    %v1634 = vsel %vm179, %v1630, -inf
    %1635 = vmax.xlane.f32.xlu0 %v1634
    %v1636 = vpop.xlane.xlu0 %1635
    %v1637 = vsel %vm179, %v1631, -inf
    %1638 = vmax.xlane.f32.xlu0 %v1637
    %v1639 = vpop.xlane.xlu0 %1638
    %v1640 = vsel %vm179, %v1632, -inf
    %1641 = vmax.xlane.f32.xlu0 %v1640
    %v1642 = vpop.xlane.xlu0 %1641
    %v1643 = vsel %vm179, %v1633, -inf
    %1644 = vmax.xlane.f32.xlu0 %v1643
    %v1645 = vpop.xlane.xlu0 %1644
    %v1646 = vsub.f32 %v1630, %v1636
    %v1647 = vsub.f32 %v1631, %v1639
    %v1648 = vsub.f32 %v1632, %v1642
    %v1649 = vsub.f32 %v1633, %v1645
    %v1650 = vmul.f32 %v1646, 1.442695
    %v1651 = vpow.pop %v1650
    %v1652 = vmul.f32 %v1647, 1.442695
    %v1653 = vpow.pop %v1652
    %v1654 = vmul.f32 %v1648, 1.442695
    %v1655 = vpow.pop %v1654
    %v1656 = vmul.f32 %v1649, 1.442695
    %v1657 = vpow.pop %v1656
    %v1658 = vsel %vm179, %v1651, 0.0
    %1659 = vadd.xlane.f32.xlu0 %v1658
    %v1660 = vpop.xlane.xlu0 %1659
    %v1661 = vsel %vm179, %v1653, 0.0
    %1662 = vadd.xlane.f32.xlu0 %v1661
    %v1663 = vpop.xlane.xlu0 %1662
    %v1664 = vsel %vm179, %v1655, 0.0
    %1665 = vadd.xlane.f32.xlu0 %v1664
    %v1666 = vpop.xlane.xlu0 %1665
    %v1667 = vsel %vm179, %v1657, 0.0
    %1668 = vadd.xlane.f32.xlu0 %v1667
    %v1669 = vpop.xlane.xlu0 %1668
    %v1670 = vrcp.pop %v1660
    %v1671 = vrcp.pop %v1663
    %v1672 = vrcp.pop %v1666
    %v1673 = vrcp.pop %v1669
    %v1674 = vmul.f32 %v1651, %v1670
    %v1675 = vmul.f32 %v1653, %v1671
    %v1676 = vmul.f32 %v1655, %v1672
    %v1677 = vmul.f32 %v1657, %v1673
    %1678 = vrot.lane.b32.xlu0 %v153, 80
    %v1679 = vpop.permute.xlu0 %1678
    %1680 = vrot.lane.b32.xlu0 %v159, 80
    %v1681 = vpop.permute.xlu0 %1680
    %v1685 = vsel %vm179, %v1674, 0
    %v1688 = vsel %vm179, %v1675, 0
    %1690 = vmatprep.subr.mxu0 0.0
    %1691 = vmatpush1.msra.mxu0 %v1679
    %1692 = vmatprep.subr.mxu0 0.0
    %1693 = vmatpush1.msra.mxu0 %v1681
    %1694 = vmatprep.subr.mxu0 0.0
    %1695 = vmatpush1.msra.mxu0 0.0
    %1696 = vmatprep.subr.mxu0 0.0
    %1697 = vmatpush1.msra.mxu0 0.0
    %1698 = vmatprep.subr.mxu0 0.0
    %1699 = vmatpush1.msra.mxu0 0.0
    %1700 = vmatprep.subr.mxu0 0.0
    %1701 = vmatpush1.msra.mxu0 0.0
    %1702 = vmatprep.subr.mxu0 0.0
    %1703 = vmatpush1.msra.mxu0 0.0
    %1704 = vmatprep.subr.mxu0 0.0
    %1705 = vmatpush1.msra.mxu0 0.0
    %1706 = vmatprep.subr.mxu0 0.0
    %1707 = vmatpush1.msra.mxu0 0.0
    %1708 = vmatprep.subr.mxu0 0.0
    %1709 = vmatpush1.msra.mxu0 0.0
    %1710 = vmatprep.subr.mxu0 0.0
    %1711 = vmatpush1.msra.mxu0 0.0
    %1712 = vmatprep.subr.mxu0 0.0
    %1713 = vmatpush1.msra.mxu0 0.0
    %1714 = vmatprep.subr.mxu0 0.0
    %1715 = vmatpush1.msra.mxu0 0.0
    %1716 = vmatprep.subr.mxu0 0.0
    %1717 = vmatpush1.msra.mxu0 0.0
    %1718 = vmatprep.subr.mxu0 0.0
    %1719 = vmatpush1.msra.mxu0 0.0
    %1720 = vmatprep.subr.mxu0 0.0
    %1721 = vmatpush1.msra.mxu0 0.0
    %1722 = vmatprep.subr.mxu0 0.0
    %1723 = vmatpush1.msra.mxu0 0.0
    %1724 = vmatprep.subr.mxu0 0.0
    %1725 = vmatpush1.msra.mxu0 0.0
    %1726 = vmatprep.subr.mxu0 0.0
    %1727 = vmatpush1.msra.mxu0 0.0
    %1728 = vmatprep.subr.mxu0 0.0
    %1729 = vmatpush1.msra.mxu0 0.0
    %1730 = vmatprep.subr.mxu0 0.0
    %1731 = vmatpush1.msra.mxu0 0.0
    %1732 = vmatprep.subr.mxu0 0.0
    %1733 = vmatpush1.msra.mxu0 0.0
    %1734 = vmatprep.subr.mxu0 0.0
    %1735 = vmatpush1.msra.mxu0 0.0
    %1736 = vmatprep.subr.mxu0 0.0
    %1737 = vmatpush1.msra.mxu0 0.0
    %1738 = vmatprep.subr.mxu0 0.0
    %1739 = vmatpush1.msra.mxu0 0.0
    %1740 = vmatprep.subr.mxu0 0.0
    %1741 = vmatpush1.msra.mxu0 0.0
    %1742 = vmatprep.subr.mxu0 0.0
    %1743 = vmatpush1.msra.mxu0 0.0
    %1744 = vmatprep.subr.mxu0 0.0
    %1745 = vmatpush1.msra.mxu0 0.0
    %1746 = vmatprep.subr.mxu0 0.0
    %1747 = vmatpush1.msra.mxu0 0.0
    %1748 = vmatprep.subr.mxu0 0.0
    %1749 = vmatpush1.msra.mxu0 0.0
    %1750 = vmatprep.subr.mxu0 0.0
    %1751 = vmatpush1.msra.mxu0 0.0
    %1752 = vmatprep.subr.mxu0 0.0
    %1753 = vmatpush1.msra.mxu0 0.0
    %1754 = vmatprep.mubr.f32.mxu0 0.0
    %1755 = vmatmul.mubr.f32.gmra.mrb[0].mxu0 %v1685
    %v1756 = vpop.f32.mrb[0].mxu0
    %v1757 = vadd.f32 0.0, %v1756
    %v1758 = vpop.f32.mrb[0].mxu0
    %1759 = vmatprep.mubr.f32.mxu0 0.0
    %1760 = vmatmul.mubr.f32.gmra.mrb[0].mxu0 %v1688
    %v1761 = vpop.f32.mrb[0].mxu0
    %v1762 = vadd.f32 0.0, %v1761
    %v1763 = vpop.f32.mrb[0].mxu0
    %1764 = vdwg.mxu0
    %1765 = vrot.lane.b32.xlu0 %v165, 80
    %v1766 = vpop.permute.xlu0 %1765
    %1767 = vrot.lane.b32.xlu0 %v171, 80
    %v1768 = vpop.permute.xlu0 %1767
    %v1772 = vsel %vm179, %v1676, 0
    %v1775 = vsel %vm179, %v1677, 0
    %1777 = vmatprep.subr.mxu0 0.0
    %1778 = vmatpush1.msra.mxu0 %v1766
    %1779 = vmatprep.subr.mxu0 0.0
    %1780 = vmatpush1.msra.mxu0 %v1768
    %1781 = vmatprep.subr.mxu0 0.0
    %1782 = vmatpush1.msra.mxu0 0.0
    %1783 = vmatprep.subr.mxu0 0.0
    %1784 = vmatpush1.msra.mxu0 0.0
    %1785 = vmatprep.subr.mxu0 0.0
    %1786 = vmatpush1.msra.mxu0 0.0
    %1787 = vmatprep.subr.mxu0 0.0
    %1788 = vmatpush1.msra.mxu0 0.0
    %1789 = vmatprep.subr.mxu0 0.0
    %1790 = vmatpush1.msra.mxu0 0.0
    %1791 = vmatprep.subr.mxu0 0.0
    %1792 = vmatpush1.msra.mxu0 0.0
    %1793 = vmatprep.subr.mxu0 0.0
    %1794 = vmatpush1.msra.mxu0 0.0
    %1795 = vmatprep.subr.mxu0 0.0
    %1796 = vmatpush1.msra.mxu0 0.0
    %1797 = vmatprep.subr.mxu0 0.0
    %1798 = vmatpush1.msra.mxu0 0.0
    %1799 = vmatprep.subr.mxu0 0.0
    %1800 = vmatpush1.msra.mxu0 0.0
    %1801 = vmatprep.subr.mxu0 0.0
    %1802 = vmatpush1.msra.mxu0 0.0
    %1803 = vmatprep.subr.mxu0 0.0
    %1804 = vmatpush1.msra.mxu0 0.0
    %1805 = vmatprep.subr.mxu0 0.0
    %1806 = vmatpush1.msra.mxu0 0.0
    %1807 = vmatprep.subr.mxu0 0.0
    %1808 = vmatpush1.msra.mxu0 0.0
    %1809 = vmatprep.subr.mxu0 0.0
    %1810 = vmatpush1.msra.mxu0 0.0
    %1811 = vmatprep.subr.mxu0 0.0
    %1812 = vmatpush1.msra.mxu0 0.0
    %1813 = vmatprep.subr.mxu0 0.0
    %1814 = vmatpush1.msra.mxu0 0.0
    %1815 = vmatprep.subr.mxu0 0.0
    %1816 = vmatpush1.msra.mxu0 0.0
    %1817 = vmatprep.subr.mxu0 0.0
    %1818 = vmatpush1.msra.mxu0 0.0
    %1819 = vmatprep.subr.mxu0 0.0
    %1820 = vmatpush1.msra.mxu0 0.0
    %1821 = vmatprep.subr.mxu0 0.0
    %1822 = vmatpush1.msra.mxu0 0.0
    %1823 = vmatprep.subr.mxu0 0.0
    %1824 = vmatpush1.msra.mxu0 0.0
    %1825 = vmatprep.subr.mxu0 0.0
    %1826 = vmatpush1.msra.mxu0 0.0
    %1827 = vmatprep.subr.mxu0 0.0
    %1828 = vmatpush1.msra.mxu0 0.0
    %1829 = vmatprep.subr.mxu0 0.0
    %1830 = vmatpush1.msra.mxu0 0.0
    %1831 = vmatprep.subr.mxu0 0.0
    %1832 = vmatpush1.msra.mxu0 0.0
    %1833 = vmatprep.subr.mxu0 0.0
    %1834 = vmatpush1.msra.mxu0 0.0
    %1835 = vmatprep.subr.mxu0 0.0
    %1836 = vmatpush1.msra.mxu0 0.0
    %1837 = vmatprep.subr.mxu0 0.0
    %1838 = vmatpush1.msra.mxu0 0.0
    %1839 = vmatprep.subr.mxu0 0.0
    %1840 = vmatpush1.msra.mxu0 0.0
    %1841 = vmatprep.mubr.f32.mxu0 0.0
    %1842 = vmatmul.mubr.f32.gmra.mrb[0].mxu0 %v1772
    %v1843 = vpop.f32.mrb[0].mxu0
    %v1844 = vadd.f32 0.0, %v1843
    %v1845 = vpop.f32.mrb[0].mxu0
    %1846 = vmatprep.mubr.f32.mxu0 0.0
    %1847 = vmatmul.mubr.f32.gmra.mrb[0].mxu0 %v1775
    %v1848 = vpop.f32.mrb[0].mxu0
    %v1849 = vadd.f32 0.0, %v1848
    %v1850 = vpop.f32.mrb[0].mxu0
    %1851 = vdwg.mxu0
    %1856 = vrot.lane.b32.xlu0 %v1757, 48
    %v1857 = vpop.permute.xlu0 %1856
    %1858 = vrot.lane.b32.xlu0 %v1762, 48
    %v1859 = vpop.permute.xlu0 %1858
    %1860 = vrot.lane.b32.xlu0 %v1844, 48
    %v1861 = vpop.permute.xlu0 %1860
    %1862 = vrot.lane.b32.xlu0 %v1849, 48
    %v1863 = vpop.permute.xlu0 %1862
    %vm1868 = vcmask 523648
    %1869 = vst.msk [vmem:[#allocation2] sm:$0xff] %vm1868, %v1857
    %1870 = vst.msk [vmem:[#allocation2 + $0x8] sm:$0xff] %vm1868, %v1859
    %1871 = vst.msk [vmem:[#allocation2 + $0x10] sm:$0xff] %vm1868, %v1861
    %1872 = vst.msk [vmem:[#allocation2 + $0x18] sm:$0xff] %vm1868, %v1863
    %v1873 = vld [vmem:[#allocation2] sm:$0xff]
    %v1874 = vld [vmem:[#allocation2 + $0x8] sm:$0xff]
    %v1875 = vld [vmem:[#allocation2 + $0x10] sm:$0xff]
    %v1876 = vld [vmem:[#allocation2 + $0x18] sm:$0xff]
    %v1877 = vld [vmem:[%s4] sm:$0xff]
    %v1878 = vld [vmem:[%s4 + $0x8] sm:$0xff]
    %v1879 = vld [vmem:[%s4 + $0x10] sm:$0xff]
    %v1880 = vld [vmem:[%s4 + $0x18] sm:$0xff]
    %v1881 = vld [vmem:[%s4 + $0x20] sm:$0xff]
    %v1882 = vld [vmem:[%s4 + $0x28] sm:$0xff]
    %v1883 = vld [vmem:[%s4 + $0x30] sm:$0xff]
    %v1884 = vld [vmem:[%s4 + $0x38] sm:$0xff]
    %v1885 = vlaneseq
    %v1886 = vshrl.u32 %v1885, 7
    %v1887 = vsub.s32 0, %v1886
    %v1888 = vrot.slane %v42, %v1887
    %v1890 = vsel %vm71, %v1873, 0
    %v1893 = vsel %vm71, %v1874, 0
    %v1896 = vsel %vm71, %v1875, 0
    %v1899 = vsel %vm71, %v1876, 0
    %1901 = vmatprep.subr.mxu0 0.0
    %1902 = vmatpush1.msra.mxu0 %v1877
    %1903 = vmatprep.subr.mxu0 0.0
    %1904 = vmatpush1.msra.mxu0 %v1878
    %1905 = vmatprep.subr.mxu0 0.0
    %1906 = vmatpush1.msra.mxu0 %v1879
    %1907 = vmatprep.subr.mxu0 0.0
    %1908 = vmatpush1.msra.mxu0 %v1880
    %1909 = vmatprep.subr.mxu0 0.0
    %1910 = vmatpush1.msra.mxu0 %v1881
    %1911 = vmatprep.subr.mxu0 0.0
    %1912 = vmatpush1.msra.mxu0 %v1882
    %1913 = vmatprep.subr.mxu0 0.0
    %1914 = vmatpush1.msra.mxu0 %v1883
    %1915 = vmatprep.subr.mxu0 0.0
    %1916 = vmatpush1.msra.mxu0 %v1884
    %1917 = vmatprep.subr.mxu0 0.0
    %1918 = vmatpush1.msra.mxu0 0.0
    %1919 = vmatprep.subr.mxu0 0.0
    %1920 = vmatpush1.msra.mxu0 0.0
    %1921 = vmatprep.subr.mxu0 0.0
    %1922 = vmatpush1.msra.mxu0 0.0
    %1923 = vmatprep.subr.mxu0 0.0
    %1924 = vmatpush1.msra.mxu0 0.0
    %1925 = vmatprep.subr.mxu0 0.0
    %1926 = vmatpush1.msra.mxu0 0.0
    %1927 = vmatprep.subr.mxu0 0.0
    %1928 = vmatpush1.msra.mxu0 0.0
    %1929 = vmatprep.subr.mxu0 0.0
    %1930 = vmatpush1.msra.mxu0 0.0
    %1931 = vmatprep.subr.mxu0 0.0
    %1932 = vmatpush1.msra.mxu0 0.0
    %1933 = vmatprep.subr.mxu0 0.0
    %1934 = vmatpush1.msra.mxu0 0.0
    %1935 = vmatprep.subr.mxu0 0.0
    %1936 = vmatpush1.msra.mxu0 0.0
    %1937 = vmatprep.subr.mxu0 0.0
    %1938 = vmatpush1.msra.mxu0 0.0
    %1939 = vmatprep.subr.mxu0 0.0
    %1940 = vmatpush1.msra.mxu0 0.0
    %1941 = vmatprep.subr.mxu0 0.0
    %1942 = vmatpush1.msra.mxu0 0.0
    %1943 = vmatprep.subr.mxu0 0.0
    %1944 = vmatpush1.msra.mxu0 0.0
    %1945 = vmatprep.subr.mxu0 0.0
    %1946 = vmatpush1.msra.mxu0 0.0
    %1947 = vmatprep.subr.mxu0 0.0
    %1948 = vmatpush1.msra.mxu0 0.0
    %1949 = vmatprep.subr.mxu0 0.0
    %1950 = vmatpush1.msra.mxu0 0.0
    %1951 = vmatprep.subr.mxu0 0.0
    %1952 = vmatpush1.msra.mxu0 0.0
    %1953 = vmatprep.subr.mxu0 0.0
    %1954 = vmatpush1.msra.mxu0 0.0
    %1955 = vmatprep.subr.mxu0 0.0
    %1956 = vmatpush1.msra.mxu0 0.0
    %1957 = vmatprep.subr.mxu0 0.0
    %1958 = vmatpush1.msra.mxu0 0.0
    %1959 = vmatprep.subr.mxu0 0.0
    %1960 = vmatpush1.msra.mxu0 0.0
    %1961 = vmatprep.subr.mxu0 0.0
    %1962 = vmatpush1.msra.mxu0 0.0
    %1963 = vmatprep.subr.mxu0 0.0
    %1964 = vmatpush1.msra.mxu0 0.0
    %1965 = vmatprep.mubr.f32.mxu0 0.0
    %1966 = vmatmul.mubr.f32.gmra.mrb[0].mxu0 %v1890
    %v1967 = vpop.f32.mrb[0].mxu0
    %v1968 = vadd.f32 %v1888, %v1967
    %v1969 = vpop.f32.mrb[0].mxu0
    %1970 = vmatprep.mubr.f32.mxu0 0.0
    %1971 = vmatmul.mubr.f32.gmra.mrb[0].mxu0 %v1893
    %v1972 = vpop.f32.mrb[0].mxu0
    %v1973 = vadd.f32 %v1888, %v1972
    %v1974 = vpop.f32.mrb[0].mxu0
    %1975 = vmatprep.mubr.f32.mxu0 0.0
    %1976 = vmatmul.mubr.f32.gmra.mrb[0].mxu0 %v1896
    %v1977 = vpop.f32.mrb[0].mxu0
    %v1978 = vadd.f32 %v1888, %v1977
    %v1979 = vpop.f32.mrb[0].mxu0
    %1980 = vmatprep.mubr.f32.mxu0 0.0
    %1981 = vmatmul.mubr.f32.gmra.mrb[0].mxu0 %v1899
    %v1982 = vpop.f32.mrb[0].mxu0
    %v1983 = vadd.f32 %v1888, %v1982
    %v1984 = vpop.f32.mrb[0].mxu0
    %1985 = vdwg.mxu0
    %v1986 = vadd.f32 %v36, %v1968
    %v1987 = vadd.f32 %v37, %v1973
    %v1988 = vadd.f32 %v38, %v1978
    %v1989 = vadd.f32 %v39, %v1983
    %v1990 = vsel %vm71, %v1986, 0.0
    %1991 = vadd.xlane.f32.xlu0 %v1990
    %v1992 = vpop.xlane.xlu0 %1991
    %v1993 = vsel %vm71, %v1987, 0.0
    %1994 = vadd.xlane.f32.xlu0 %v1993
    %v1995 = vpop.xlane.xlu0 %1994
    %v1996 = vsel %vm71, %v1988, 0.0
    %1997 = vadd.xlane.f32.xlu0 %v1996
    %v1998 = vpop.xlane.xlu0 %1997
    %v1999 = vsel %vm71, %v1989, 0.0
    %2000 = vadd.xlane.f32.xlu0 %v1999
    %v2001 = vpop.xlane.xlu0 %2000
    %v2002 = vrcp.pop 64.0
    %v2003 = vmul.f32 %v1992, %v2002
    %v2004 = vmul.f32 %v1995, %v2002
    %v2005 = vmul.f32 %v1998, %v2002
    %v2006 = vmul.f32 %v2001, %v2002
    %v2007 = vsub.f32 %v1986, %v2003
    %v2008 = vsub.f32 %v1987, %v2004
    %v2009 = vsub.f32 %v1988, %v2005
    %v2010 = vsub.f32 %v1989, %v2006
    %v2011 = vmul.f32 %v2007, %v2007
    %v2012 = vmul.f32 %v2008, %v2008
    %v2013 = vmul.f32 %v2009, %v2009
    %v2014 = vmul.f32 %v2010, %v2010
    %v2015 = vsel %vm71, %v2011, 0.0
    %2016 = vadd.xlane.f32.xlu0 %v2015
    %v2017 = vpop.xlane.xlu0 %2016
    %v2018 = vsel %vm71, %v2012, 0.0
    %2019 = vadd.xlane.f32.xlu0 %v2018
    %v2020 = vpop.xlane.xlu0 %2019
    %v2021 = vsel %vm71, %v2013, 0.0
    %2022 = vadd.xlane.f32.xlu0 %v2021
    %v2023 = vpop.xlane.xlu0 %2022
    %v2024 = vsel %vm71, %v2014, 0.0
    %2025 = vadd.xlane.f32.xlu0 %v2024
    %v2026 = vpop.xlane.xlu0 %2025
    %v2027 = vmul.f32 %v2017, %v2002
    %v2028 = vmul.f32 %v2020, %v2002
    %v2029 = vmul.f32 %v2023, %v2002
    %v2030 = vmul.f32 %v2026, %v2002
    %v2031 = vadd.f32 %v2027, 1e-12
    %v2032 = vadd.f32 %v2028, 1e-12
    %v2033 = vadd.f32 %v2029, 1e-12
    %v2034 = vadd.f32 %v2030, 1e-12
    %v2035 = vrsqrt.pop %v2031
    %v2036 = vrsqrt.pop %v2032
    %v2037 = vrsqrt.pop %v2033
    %v2038 = vrsqrt.pop %v2034
    %v2039 = vmul.f32 %v2007, %v2035
    %v2040 = vmul.f32 %v2008, %v2036
    %v2041 = vmul.f32 %v2009, %v2037
    %v2042 = vmul.f32 %v2010, %v2038
    %v2043 = vlaneseq
    %v2044 = vshrl.u32 %v2043, 7
    %v2045 = vsub.s32 1, %v2044
    %v2046 = vrot.slane %v42, %v2045
    %v2047 = vmul.f32 %v2039, %v2046
    %v2048 = vmul.f32 %v2040, %v2046
    %v2049 = vmul.f32 %v2041, %v2046
    %v2050 = vmul.f32 %v2042, %v2046
    %v2051 = vlaneseq
    %v2052 = vshrl.u32 %v2051, 7
    %v2053 = vsub.s32 2, %v2052
    %v2054 = vrot.slane %v42, %v2053
    %v2055 = vadd.f32 %v2047, %v2054
    %v2056 = vadd.f32 %v2048, %v2054
    %v2057 = vadd.f32 %v2049, %v2054
    %v2058 = vadd.f32 %v2050, %v2054
    %v2059 = vld [vmem:[%s5] sm:$0xff]
    %v2060 = vld [vmem:[%s5 + $0x8] sm:$0xff]
    %v2061 = vld [vmem:[%s5 + $0x10] sm:$0xff]
    %v2062 = vld [vmem:[%s5 + $0x18] sm:$0xff]
    %v2063 = vld [vmem:[%s5 + $0x20] sm:$0xff]
    %v2064 = vld [vmem:[%s5 + $0x28] sm:$0xff]
    %v2065 = vld [vmem:[%s5 + $0x30] sm:$0xff]
    %v2066 = vld [vmem:[%s5 + $0x38] sm:$0xff]
    %v2067 = vld [vmem:[%s8] sm:$0x1]
    %v2069 = vlaneseq
    %v2070 = vshrl.u32 %v2069, 7
    %v2071 = vsub.s32 0, %v2070
    %v2072 = vrot.slane %v2067, %v2071
    %v2075 = vsel %vm71, %v2055, 0
    %v2078 = vsel %vm71, %v2056, 0
    %v2081 = vsel %vm71, %v2057, 0
    %v2084 = vsel %vm71, %v2058, 0
    %2086 = vmatprep.subr.mxu0 0.0
    %2087 = vmatpush1.msra.mxu0 %v2059
    %2088 = vmatprep.subr.mxu0 0.0
    %2089 = vmatpush1.msra.mxu0 %v2060
    %2090 = vmatprep.subr.mxu0 0.0
    %2091 = vmatpush1.msra.mxu0 %v2061
    %2092 = vmatprep.subr.mxu0 0.0
    %2093 = vmatpush1.msra.mxu0 %v2062
    %2094 = vmatprep.subr.mxu0 0.0
    %2095 = vmatpush1.msra.mxu0 %v2063
    %2096 = vmatprep.subr.mxu0 0.0
    %2097 = vmatpush1.msra.mxu0 %v2064
    %2098 = vmatprep.subr.mxu0 0.0
    %2099 = vmatpush1.msra.mxu0 %v2065
    %2100 = vmatprep.subr.mxu0 0.0
    %2101 = vmatpush1.msra.mxu0 %v2066
    %2102 = vmatprep.subr.mxu0 0.0
    %2103 = vmatpush1.msra.mxu0 0.0
    %2104 = vmatprep.subr.mxu0 0.0
    %2105 = vmatpush1.msra.mxu0 0.0
    %2106 = vmatprep.subr.mxu0 0.0
    %2107 = vmatpush1.msra.mxu0 0.0
    %2108 = vmatprep.subr.mxu0 0.0
    %2109 = vmatpush1.msra.mxu0 0.0
    %2110 = vmatprep.subr.mxu0 0.0
    %2111 = vmatpush1.msra.mxu0 0.0
    %2112 = vmatprep.subr.mxu0 0.0
    %2113 = vmatpush1.msra.mxu0 0.0
    %2114 = vmatprep.subr.mxu0 0.0
    %2115 = vmatpush1.msra.mxu0 0.0
    %2116 = vmatprep.subr.mxu0 0.0
    %2117 = vmatpush1.msra.mxu0 0.0
    %2118 = vmatprep.subr.mxu0 0.0
    %2119 = vmatpush1.msra.mxu0 0.0
    %2120 = vmatprep.subr.mxu0 0.0
    %2121 = vmatpush1.msra.mxu0 0.0
    %2122 = vmatprep.subr.mxu0 0.0
    %2123 = vmatpush1.msra.mxu0 0.0
    %2124 = vmatprep.subr.mxu0 0.0
    %2125 = vmatpush1.msra.mxu0 0.0
    %2126 = vmatprep.subr.mxu0 0.0
    %2127 = vmatpush1.msra.mxu0 0.0
    %2128 = vmatprep.subr.mxu0 0.0
    %2129 = vmatpush1.msra.mxu0 0.0
    %2130 = vmatprep.subr.mxu0 0.0
    %2131 = vmatpush1.msra.mxu0 0.0
    %2132 = vmatprep.subr.mxu0 0.0
    %2133 = vmatpush1.msra.mxu0 0.0
    %2134 = vmatprep.subr.mxu0 0.0
    %2135 = vmatpush1.msra.mxu0 0.0
    %2136 = vmatprep.subr.mxu0 0.0
    %2137 = vmatpush1.msra.mxu0 0.0
    %2138 = vmatprep.subr.mxu0 0.0
    %2139 = vmatpush1.msra.mxu0 0.0
    %2140 = vmatprep.subr.mxu0 0.0
    %2141 = vmatpush1.msra.mxu0 0.0
    %2142 = vmatprep.subr.mxu0 0.0
    %2143 = vmatpush1.msra.mxu0 0.0
    %2144 = vmatprep.subr.mxu0 0.0
    %2145 = vmatpush1.msra.mxu0 0.0
    %2146 = vmatprep.subr.mxu0 0.0
    %2147 = vmatpush1.msra.mxu0 0.0
    %2148 = vmatprep.subr.mxu0 0.0
    %2149 = vmatpush1.msra.mxu0 0.0
    %2150 = vmatprep.mubr.f32.mxu0 0.0
    %2151 = vmatmul.mubr.f32.gmra.mrb[0].mxu0 %v2075
    %v2152 = vpop.f32.mrb[0].mxu0
    %v2153 = vadd.f32 %v2072, %v2152
    %v2154 = vpop.f32.mrb[0].mxu0
    %2155 = vmatprep.mubr.f32.mxu0 0.0
    %2156 = vmatmul.mubr.f32.gmra.mrb[0].mxu0 %v2078
    %v2157 = vpop.f32.mrb[0].mxu0
    %v2158 = vadd.f32 %v2072, %v2157
    %v2159 = vpop.f32.mrb[0].mxu0
    %2160 = vmatprep.mubr.f32.mxu0 0.0
    %2161 = vmatmul.mubr.f32.gmra.mrb[0].mxu0 %v2081
    %v2162 = vpop.f32.mrb[0].mxu0
    %v2163 = vadd.f32 %v2072, %v2162
    %v2164 = vpop.f32.mrb[0].mxu0
    %2165 = vmatprep.mubr.f32.mxu0 0.0
    %2166 = vmatmul.mubr.f32.gmra.mrb[0].mxu0 %v2084
    %v2167 = vpop.f32.mrb[0].mxu0
    %v2168 = vadd.f32 %v2072, %v2167
    %v2169 = vpop.f32.mrb[0].mxu0
    %2170 = vdwg.mxu0
    %v2171 = vmul.f32 %v2153, %v2153
    %v2172 = vmul.f32 %v2158, %v2158
    %v2173 = vmul.f32 %v2163, %v2163
    %v2174 = vmul.f32 %v2168, %v2168
    %v2175 = vmul.f32 %v2153, %v2171
    %v2176 = vmul.f32 %v2158, %v2172
    %v2177 = vmul.f32 %v2163, %v2173
    %v2178 = vmul.f32 %v2168, %v2174
    %v2179 = vmul.f32 %v2175, 0.044715
    %v2180 = vmul.f32 %v2176, 0.044715
    %v2181 = vmul.f32 %v2177, 0.044715
    %v2182 = vmul.f32 %v2178, 0.044715
    %v2183 = vadd.f32 %v2153, %v2179
    %v2184 = vadd.f32 %v2158, %v2180
    %v2185 = vadd.f32 %v2163, %v2181
    %v2186 = vadd.f32 %v2168, %v2182
    %v2187 = vmul.f32 %v2183, 0.7978846
    %v2188 = vmul.f32 %v2184, 0.7978846
    %v2189 = vmul.f32 %v2185, 0.7978846
    %v2190 = vmul.f32 %v2186, 0.7978846
    %v2191 = vtanh.pop %v2187
    %v2192 = vtanh.pop %v2188
    %v2193 = vtanh.pop %v2189
    %v2194 = vtanh.pop %v2190
    %v2195 = vadd.f32 %v2191, 1.0
    %v2196 = vadd.f32 %v2192, 1.0
    %v2197 = vadd.f32 %v2193, 1.0
    %v2198 = vadd.f32 %v2194, 1.0
    %v2199 = vmul.f32 %v2195, 0.5
    %v2200 = vmul.f32 %v2196, 0.5
    %v2201 = vmul.f32 %v2197, 0.5
    %v2202 = vmul.f32 %v2198, 0.5
    %v2203 = vmul.f32 %v2153, %v2199
    %v2204 = vmul.f32 %v2158, %v2200
    %v2205 = vmul.f32 %v2163, %v2201
    %v2206 = vmul.f32 %v2168, %v2202
    %v2207 = vld [vmem:[%s6] sm:$0xff]
    %v2208 = vld [vmem:[%s6 + $0x8] sm:$0xff]
    %v2209 = vld [vmem:[%s6 + $0x10] sm:$0xff]
    %v2210 = vld [vmem:[%s6 + $0x18] sm:$0xff]
    %v2211 = vld [vmem:[%s6 + $0x20] sm:$0xff]
    %v2212 = vld [vmem:[%s6 + $0x28] sm:$0xff]
    %v2213 = vld [vmem:[%s6 + $0x30] sm:$0xff]
    %v2214 = vld [vmem:[%s6 + $0x38] sm:$0xff]
    %v2215 = vld [vmem:[%s6 + $0x40] sm:$0xff]
    %v2216 = vld [vmem:[%s6 + $0x48] sm:$0xff]
    %v2217 = vld [vmem:[%s6 + $0x50] sm:$0xff]
    %v2218 = vld [vmem:[%s6 + $0x58] sm:$0xff]
    %v2219 = vld [vmem:[%s6 + $0x60] sm:$0xff]
    %v2220 = vld [vmem:[%s6 + $0x68] sm:$0xff]
    %v2221 = vld [vmem:[%s6 + $0x70] sm:$0xff]
    %v2222 = vld [vmem:[%s6 + $0x78] sm:$0xff]
    %v2223 = vlaneseq
    %v2224 = vshrl.u32 %v2223, 7
    %v2225 = vsub.s32 3, %v2224
    %v2226 = vrot.slane %v42, %v2225
    %2227 = vmatprep.subr.mxu0 0.0
    %2228 = vmatpush1.msra.mxu0 %v2207
    %2229 = vmatprep.subr.mxu0 0.0
    %2230 = vmatpush1.msra.mxu0 %v2208
    %2231 = vmatprep.subr.mxu0 0.0
    %2232 = vmatpush1.msra.mxu0 %v2209
    %2233 = vmatprep.subr.mxu0 0.0
    %2234 = vmatpush1.msra.mxu0 %v2210
    %2235 = vmatprep.subr.mxu0 0.0
    %2236 = vmatpush1.msra.mxu0 %v2211
    %2237 = vmatprep.subr.mxu0 0.0
    %2238 = vmatpush1.msra.mxu0 %v2212
    %2239 = vmatprep.subr.mxu0 0.0
    %2240 = vmatpush1.msra.mxu0 %v2213
    %2241 = vmatprep.subr.mxu0 0.0
    %2242 = vmatpush1.msra.mxu0 %v2214
    %2243 = vmatprep.subr.mxu0 0.0
    %2244 = vmatpush1.msra.mxu0 %v2215
    %2245 = vmatprep.subr.mxu0 0.0
    %2246 = vmatpush1.msra.mxu0 %v2216
    %2247 = vmatprep.subr.mxu0 0.0
    %2248 = vmatpush1.msra.mxu0 %v2217
    %2249 = vmatprep.subr.mxu0 0.0
    %2250 = vmatpush1.msra.mxu0 %v2218
    %2251 = vmatprep.subr.mxu0 0.0
    %2252 = vmatpush1.msra.mxu0 %v2219
    %2253 = vmatprep.subr.mxu0 0.0
    %2254 = vmatpush1.msra.mxu0 %v2220
    %2255 = vmatprep.subr.mxu0 0.0
    %2256 = vmatpush1.msra.mxu0 %v2221
    %2257 = vmatprep.subr.mxu0 0.0
    %2258 = vmatpush1.msra.mxu0 %v2222
    %2259 = vmatprep.subr.mxu0 0.0
    %2260 = vmatpush1.msra.mxu0 0.0
    %2261 = vmatprep.subr.mxu0 0.0
    %2262 = vmatpush1.msra.mxu0 0.0
    %2263 = vmatprep.subr.mxu0 0.0
    %2264 = vmatpush1.msra.mxu0 0.0
    %2265 = vmatprep.subr.mxu0 0.0
    %2266 = vmatpush1.msra.mxu0 0.0
    %2267 = vmatprep.subr.mxu0 0.0
    %2268 = vmatpush1.msra.mxu0 0.0
    %2269 = vmatprep.subr.mxu0 0.0
    %2270 = vmatpush1.msra.mxu0 0.0
    %2271 = vmatprep.subr.mxu0 0.0
    %2272 = vmatpush1.msra.mxu0 0.0
    %2273 = vmatprep.subr.mxu0 0.0
    %2274 = vmatpush1.msra.mxu0 0.0
    %2275 = vmatprep.subr.mxu0 0.0
    %2276 = vmatpush1.msra.mxu0 0.0
    %2277 = vmatprep.subr.mxu0 0.0
    %2278 = vmatpush1.msra.mxu0 0.0
    %2279 = vmatprep.subr.mxu0 0.0
    %2280 = vmatpush1.msra.mxu0 0.0
    %2281 = vmatprep.subr.mxu0 0.0
    %2282 = vmatpush1.msra.mxu0 0.0
    %2283 = vmatprep.subr.mxu0 0.0
    %2284 = vmatpush1.msra.mxu0 0.0
    %2285 = vmatprep.subr.mxu0 0.0
    %2286 = vmatpush1.msra.mxu0 0.0
    %2287 = vmatprep.subr.mxu0 0.0
    %2288 = vmatpush1.msra.mxu0 0.0
    %2289 = vmatprep.subr.mxu0 0.0
    %2290 = vmatpush1.msra.mxu0 0.0
    %2291 = vmatprep.mubr.f32.mxu0 0.0
    %2292 = vmatmul.mubr.f32.gmra.mrb[0].mxu0 %v2203
    %v2293 = vpop.f32.mrb[0].mxu0
    %v2294 = vadd.f32 %v2226, %v2293
    %v2295 = vpop.f32.mrb[0].mxu0
    %2296 = vmatprep.mubr.f32.mxu0 0.0
    %2297 = vmatmul.mubr.f32.gmra.mrb[0].mxu0 %v2204
    %v2298 = vpop.f32.mrb[0].mxu0
    %v2299 = vadd.f32 %v2226, %v2298
    %v2300 = vpop.f32.mrb[0].mxu0
    %2301 = vmatprep.mubr.f32.mxu0 0.0
    %2302 = vmatmul.mubr.f32.gmra.mrb[0].mxu0 %v2205
    %v2303 = vpop.f32.mrb[0].mxu0
    %v2304 = vadd.f32 %v2226, %v2303
    %v2305 = vpop.f32.mrb[0].mxu0
    %2306 = vmatprep.mubr.f32.mxu0 0.0
    %2307 = vmatmul.mubr.f32.gmra.mrb[0].mxu0 %v2206
    %v2308 = vpop.f32.mrb[0].mxu0
    %v2309 = vadd.f32 %v2226, %v2308
    %v2310 = vpop.f32.mrb[0].mxu0
    %2311 = vdwg.mxu0
    %v2312 = vadd.f32 %v2055, %v2294
    %v2313 = vadd.f32 %v2056, %v2299
    %v2314 = vadd.f32 %v2057, %v2304
    %v2315 = vadd.f32 %v2058, %v2309
    %v2316 = vsel %vm71, %v2312, 0.0
    %2317 = vadd.xlane.f32.xlu0 %v2316
    %v2318 = vpop.xlane.xlu0 %2317
    %v2319 = vsel %vm71, %v2313, 0.0
    %2320 = vadd.xlane.f32.xlu0 %v2319
    %v2321 = vpop.xlane.xlu0 %2320
    %v2322 = vsel %vm71, %v2314, 0.0
    %2323 = vadd.xlane.f32.xlu0 %v2322
    %v2324 = vpop.xlane.xlu0 %2323
    %v2325 = vsel %vm71, %v2315, 0.0
    %2326 = vadd.xlane.f32.xlu0 %v2325
    %v2327 = vpop.xlane.xlu0 %2326
    %v2328 = vmul.f32 %v2318, %v2002
    %v2329 = vmul.f32 %v2321, %v2002
    %v2330 = vmul.f32 %v2324, %v2002
    %v2331 = vmul.f32 %v2327, %v2002
    %v2332 = vsub.f32 %v2312, %v2328
    %v2333 = vsub.f32 %v2313, %v2329
    %v2334 = vsub.f32 %v2314, %v2330
    %v2335 = vsub.f32 %v2315, %v2331
    %v2336 = vmul.f32 %v2332, %v2332
    %v2337 = vmul.f32 %v2333, %v2333
    %v2338 = vmul.f32 %v2334, %v2334
    %v2339 = vmul.f32 %v2335, %v2335
    %v2340 = vsel %vm71, %v2336, 0.0
    %2341 = vadd.xlane.f32.xlu0 %v2340
    %v2342 = vpop.xlane.xlu0 %2341
    %v2343 = vsel %vm71, %v2337, 0.0
    %2344 = vadd.xlane.f32.xlu0 %v2343
    %v2345 = vpop.xlane.xlu0 %2344
    %v2346 = vsel %vm71, %v2338, 0.0
    %2347 = vadd.xlane.f32.xlu0 %v2346
    %v2348 = vpop.xlane.xlu0 %2347
    %v2349 = vsel %vm71, %v2339, 0.0
    %2350 = vadd.xlane.f32.xlu0 %v2349
    %v2351 = vpop.xlane.xlu0 %2350
    %v2352 = vmul.f32 %v2342, %v2002
    %v2353 = vmul.f32 %v2345, %v2002
    %v2354 = vmul.f32 %v2348, %v2002
    %v2355 = vmul.f32 %v2351, %v2002
    %v2356 = vadd.f32 %v2352, 1e-12
    %v2357 = vadd.f32 %v2353, 1e-12
    %v2358 = vadd.f32 %v2354, 1e-12
    %v2359 = vadd.f32 %v2355, 1e-12
    %v2360 = vrsqrt.pop %v2356
    %v2361 = vrsqrt.pop %v2357
    %v2362 = vrsqrt.pop %v2358
    %v2363 = vrsqrt.pop %v2359
    %v2364 = vmul.f32 %v2332, %v2360
    %v2365 = vmul.f32 %v2333, %v2361
    %v2366 = vmul.f32 %v2334, %v2362
    %v2367 = vmul.f32 %v2335, %v2363
    %v2368 = vlaneseq
    %v2369 = vshrl.u32 %v2368, 7
    %v2370 = vsub.s32 4, %v2369
    %v2371 = vrot.slane %v42, %v2370
    %v2372 = vmul.f32 %v2364, %v2371
    %v2373 = vmul.f32 %v2365, %v2371
    %v2374 = vmul.f32 %v2366, %v2371
    %v2375 = vmul.f32 %v2367, %v2371
    %v2376 = vlaneseq
    %v2377 = vshrl.u32 %v2376, 7
    %v2378 = vsub.s32 5, %v2377
    %v2379 = vrot.slane %v42, %v2378
    %v2380 = vadd.f32 %v2372, %v2379
    %v2381 = vadd.f32 %v2373, %v2379
    %v2382 = vadd.f32 %v2374, %v2379
    %v2383 = vadd.f32 %v2375, %v2379
    %v2384 = vld [vmem:[%s2] sm:$0xf]
    %v2385 = vld [vmem:[%s2 + $0x4] sm:$0xf]
    %vm2386 = vcmask 125952
    %v2387 = vsel %vm2386, %v2384, 0.0
    %2388 = vadd.xlane.f32.xlu0 %v2387
    %v2389 = vpop.xlane.xlu0 %2388
    %v2390 = vsel %vm2386, %v2385, 0.0
    %2391 = vadd.xlane.f32.xlu0 %v2390
    %v2392 = vpop.xlane.xlu0 %2391
    %v2394 = vsel %vm179, %v2384, 0
    %2396 = vmatprep.subr.mxu0 0.0
    %2397 = vmatpush1.msra.mxu0 %v2380
    %2398 = vmatprep.subr.mxu0 0.0
    %2399 = vmatpush1.msra.mxu0 %v2381
    %2400 = vmatprep.subr.mxu0 0.0
    %2401 = vmatpush1.msra.mxu0 0.0
    %2402 = vmatprep.subr.mxu0 0.0
    %2403 = vmatpush1.msra.mxu0 0.0
    %2404 = vmatprep.subr.mxu0 0.0
    %2405 = vmatpush1.msra.mxu0 0.0
    %2406 = vmatprep.subr.mxu0 0.0
    %2407 = vmatpush1.msra.mxu0 0.0
    %2408 = vmatprep.subr.mxu0 0.0
    %2409 = vmatpush1.msra.mxu0 0.0
    %2410 = vmatprep.subr.mxu0 0.0
    %2411 = vmatpush1.msra.mxu0 0.0
    %2412 = vmatprep.subr.mxu0 0.0
    %2413 = vmatpush1.msra.mxu0 0.0
    %2414 = vmatprep.subr.mxu0 0.0
    %2415 = vmatpush1.msra.mxu0 0.0
    %2416 = vmatprep.subr.mxu0 0.0
    %2417 = vmatpush1.msra.mxu0 0.0
    %2418 = vmatprep.subr.mxu0 0.0
    %2419 = vmatpush1.msra.mxu0 0.0
    %2420 = vmatprep.subr.mxu0 0.0
    %2421 = vmatpush1.msra.mxu0 0.0
    %2422 = vmatprep.subr.mxu0 0.0
    %2423 = vmatpush1.msra.mxu0 0.0
    %2424 = vmatprep.subr.mxu0 0.0
    %2425 = vmatpush1.msra.mxu0 0.0
    %2426 = vmatprep.subr.mxu0 0.0
    %2427 = vmatpush1.msra.mxu0 0.0
    %2428 = vmatprep.subr.mxu0 0.0
    %2429 = vmatpush1.msra.mxu0 0.0
    %2430 = vmatprep.subr.mxu0 0.0
    %2431 = vmatpush1.msra.mxu0 0.0
    %2432 = vmatprep.subr.mxu0 0.0
    %2433 = vmatpush1.msra.mxu0 0.0
    %2434 = vmatprep.subr.mxu0 0.0
    %2435 = vmatpush1.msra.mxu0 0.0
    %2436 = vmatprep.subr.mxu0 0.0
    %2437 = vmatpush1.msra.mxu0 0.0
    %2438 = vmatprep.subr.mxu0 0.0
    %2439 = vmatpush1.msra.mxu0 0.0
    %2440 = vmatprep.subr.mxu0 0.0
    %2441 = vmatpush1.msra.mxu0 0.0
    %2442 = vmatprep.subr.mxu0 0.0
    %2443 = vmatpush1.msra.mxu0 0.0
    %2444 = vmatprep.subr.mxu0 0.0
    %2445 = vmatpush1.msra.mxu0 0.0
    %2446 = vmatprep.subr.mxu0 0.0
    %2447 = vmatpush1.msra.mxu0 0.0
    %2448 = vmatprep.subr.mxu0 0.0
    %2449 = vmatpush1.msra.mxu0 0.0
    %2450 = vmatprep.subr.mxu0 0.0
    %2451 = vmatpush1.msra.mxu0 0.0
    %2452 = vmatprep.subr.mxu0 0.0
    %2453 = vmatpush1.msra.mxu0 0.0
    %2454 = vmatprep.subr.mxu0 0.0
    %2455 = vmatpush1.msra.mxu0 0.0
    %2456 = vmatprep.subr.mxu0 0.0
    %2457 = vmatpush1.msra.mxu0 0.0
    %2458 = vmatprep.subr.mxu0 0.0
    %2459 = vmatpush1.msra.mxu0 0.0
    %2460 = vmatprep.mubr.f32.mxu0 0.0
    %2461 = vmatmul.mubr.f32.gmra.mrb[0].mxu0 %v2394
    %v2462 = vpop.f32.mrb[0].mxu0
    %v2463 = vadd.f32 0.0, %v2462
    %v2464 = vpop.f32.mrb[0].mxu0
    %2465 = vdwg.mxu0
    %v2467 = vsel %vm179, %v2385, 0
    %2469 = vmatprep.subr.mxu0 0.0
    %2470 = vmatpush1.msra.mxu0 %v2382
    %2471 = vmatprep.subr.mxu0 0.0
    %2472 = vmatpush1.msra.mxu0 %v2383
    %2473 = vmatprep.subr.mxu0 0.0
    %2474 = vmatpush1.msra.mxu0 0.0
    %2475 = vmatprep.subr.mxu0 0.0
    %2476 = vmatpush1.msra.mxu0 0.0
    %2477 = vmatprep.subr.mxu0 0.0
    %2478 = vmatpush1.msra.mxu0 0.0
    %2479 = vmatprep.subr.mxu0 0.0
    %2480 = vmatpush1.msra.mxu0 0.0
    %2481 = vmatprep.subr.mxu0 0.0
    %2482 = vmatpush1.msra.mxu0 0.0
    %2483 = vmatprep.subr.mxu0 0.0
    %2484 = vmatpush1.msra.mxu0 0.0
    %2485 = vmatprep.subr.mxu0 0.0
    %2486 = vmatpush1.msra.mxu0 0.0
    %2487 = vmatprep.subr.mxu0 0.0
    %2488 = vmatpush1.msra.mxu0 0.0
    %2489 = vmatprep.subr.mxu0 0.0
    %2490 = vmatpush1.msra.mxu0 0.0
    %2491 = vmatprep.subr.mxu0 0.0
    %2492 = vmatpush1.msra.mxu0 0.0
    %2493 = vmatprep.subr.mxu0 0.0
    %2494 = vmatpush1.msra.mxu0 0.0
    %2495 = vmatprep.subr.mxu0 0.0
    %2496 = vmatpush1.msra.mxu0 0.0
    %2497 = vmatprep.subr.mxu0 0.0
    %2498 = vmatpush1.msra.mxu0 0.0
    %2499 = vmatprep.subr.mxu0 0.0
    %2500 = vmatpush1.msra.mxu0 0.0
    %2501 = vmatprep.subr.mxu0 0.0
    %2502 = vmatpush1.msra.mxu0 0.0
    %2503 = vmatprep.subr.mxu0 0.0
    %2504 = vmatpush1.msra.mxu0 0.0
    %2505 = vmatprep.subr.mxu0 0.0
    %2506 = vmatpush1.msra.mxu0 0.0
    %2507 = vmatprep.subr.mxu0 0.0
    %2508 = vmatpush1.msra.mxu0 0.0
    %2509 = vmatprep.subr.mxu0 0.0
    %2510 = vmatpush1.msra.mxu0 0.0
    %2511 = vmatprep.subr.mxu0 0.0
    %2512 = vmatpush1.msra.mxu0 0.0
    %2513 = vmatprep.subr.mxu0 0.0
    %2514 = vmatpush1.msra.mxu0 0.0
    %2515 = vmatprep.subr.mxu0 0.0
    %2516 = vmatpush1.msra.mxu0 0.0
    %2517 = vmatprep.subr.mxu0 0.0
    %2518 = vmatpush1.msra.mxu0 0.0
    %2519 = vmatprep.subr.mxu0 0.0
    %2520 = vmatpush1.msra.mxu0 0.0
    %2521 = vmatprep.subr.mxu0 0.0
    %2522 = vmatpush1.msra.mxu0 0.0
    %2523 = vmatprep.subr.mxu0 0.0
    %2524 = vmatpush1.msra.mxu0 0.0
    %2525 = vmatprep.subr.mxu0 0.0
    %2526 = vmatpush1.msra.mxu0 0.0
    %2527 = vmatprep.subr.mxu0 0.0
    %2528 = vmatpush1.msra.mxu0 0.0
    %2529 = vmatprep.subr.mxu0 0.0
    %2530 = vmatpush1.msra.mxu0 0.0
    %2531 = vmatprep.subr.mxu0 0.0
    %2532 = vmatpush1.msra.mxu0 0.0
    %2533 = vmatprep.mubr.f32.mxu0 0.0
    %2534 = vmatmul.mubr.f32.gmra.mrb[0].mxu0 %v2467
    %v2535 = vpop.f32.mrb[0].mxu0
    %v2536 = vadd.f32 0.0, %v2535
    %v2537 = vpop.f32.mrb[0].mxu0
    %2538 = vdwg.mxu0
    %v2539 = vmax.f32 %v2389, 1.0
    %v2540 = vmax.f32 %v2392, 1.0
    %v2541 = vrcp.pop %v2539
    %v2542 = vrcp.pop %v2540
    %v2543 = vmul.f32 %v2463, %v2541
    %v2544 = vmul.f32 %v2536, %v2542
    %vm2545 = vcmask 519168
    %2546 = vst.msk [vmem:[#allocation3] sm:$0xf] %vm2545, %v2543
    %2547 = vst.msk [vmem:[#allocation3 + $0x4] sm:$0xf] %vm2545, %v2544
    // Predicated region
    $region42: #{forward.1} parent=1 // pred_check
      _
    $region43: #{forward.1} parent=1 // pred_check_branch
      %2549 = sbr.rel (0) target = $region45
    $region44: #{forward.1} parent=1 // pred_region
      %s2551 = ssub.s32 128, 128
      %2552 = vsyncadd [#allocation4], %s2551
      %s2553 = sshll.u32 [#allocation3], 4
      %s2554 = int_to_ptr.vmem [resolvable:$true] %s2553
      %2559 = dma.vmem_to_hbm [thread:$0]  %s2554, 128, %s10, [#allocation4], 64, 64, 4
    $region45: #{forward.1} parent=1 // pred_fallthru
      _
    // Predicated region
    $region46: #{forward.1} parent=1 // pred_check
      _
    $region47: #{forward.1} parent=1 // pred_check_branch
      %2561 = sbr.rel (0) target = $region49
    $region48: #{forward.1} parent=1 // pred_region
      %2562 = dma.done [#allocation4], 128
    $region49: #{forward.1} parent=1 // pred_fallthru
      _
    %2563 = vsyncpa [#allocation4], 1

</llo_original>
